<compile_context>
chip_gen: v7x
topology: tpu7x:2x2x1
jax: 0.10.0
libtpu: 0.0.40
codegen_flags: <defaults>
</compile_context>

<pallas_src>
import functools
from typing import NamedTuple

import numpy as np
import jax
import jax.numpy as jnp
from jax import lax
from jax.experimental import pallas as pl
from jax.experimental.pallas import tpu as pltpu

EPS = 1e-8      # cosine-similarity normalization epsilon
KTOP = 9        # self.k = 9 in the PyTorch module
NEG = -1e30     # "minus infinity" for masking (cos sims are in [-1, 1])
LANE = 128
SUB = 8


def _round_up(x, m):
    return (x + m - 1) // m * m


def fused_query_cluster_kernel(mxu_dtype, nq, n_live, x_ref, w_ref, b_ref,
                               avg_ref, qsel_ref, tao_ref, o_ref):
    """One episode of encoder + query clustering, fully fused.

    x_ref:    (B, F)     flattened images                         (mxu_dtype)
    w_ref:    (F, Dp)    encoder weight, D zero-padded to Dp      (mxu_dtype)
    b_ref:    (1, Dp)    encoder bias, zero-padded                (f32)
    avg_ref:  (Np, B)    prototype averaging matrix (rows>=n = 0) (mxu_dtype)
    qsel_ref: (NQp, B)   0/1 query-row selection (rows>=NQ = 0)   (mxu_dtype)
    tao_ref:  (1,)       temperature (SMEM scalar, f32)
    o_ref:    (NQp, Np)  tao * cosine(adapted_query, proto), lane-dense (f32)
    """
    # ---- encoder: linear + ReLU (MXU matmul, f32 accumulation) ----
    feat = jnp.maximum(
        jnp.dot(x_ref[...], w_ref[...], preferred_element_type=jnp.float32)
        + b_ref[...],
        0.0,
    )                                                              # (B, Dp) f32
    feat_m = feat.astype(mxu_dtype)

    # ---- prototype mean & query gather as tiny MXU matmuls ----
    proto = jnp.dot(avg_ref[...], feat_m,
                    preferred_element_type=jnp.float32)            # (Np, Dp)
    query = jnp.dot(qsel_ref[...], feat_m,
                    preferred_element_type=jnp.float32)            # (NQp, Dp)
    query_m = query.astype(mxu_dtype)

    # ---- pairwise cosine similarity of queries (VPU math in f32) ----
    qn = query * lax.rsqrt(jnp.sum(query * query, -1, keepdims=True) + EPS)
    qn_m = qn.astype(mxu_dtype)
    sim = lax.dot_general(qn_m, qn_m, (((1,), (1,)), ((), ())),
                          preferred_element_type=jnp.float32)      # (NQp, NQp)

    # Padded query columns (zero query rows) must never enter top-k / sel:
    # mask them to NEG before the threshold computation.
    nq_pad = sim.shape[-1]
    col_ok = lax.broadcasted_iota(jnp.int32, (1, nq_pad), 1) < nq
    sim = jnp.where(col_ok, sim, NEG)

    # ---- k-th largest value per row via iterative masked max ----
    # (== torch.topk threshold; identical mask assuming no exact ties)
    work = sim
    thr = jnp.max(work, axis=-1, keepdims=True)
    for _ in range(KTOP - 1):
        work = jnp.where(work >= thr, NEG, work)
        thr = jnp.max(work, axis=-1, keepdims=True)

    # mutual top-k mask via symmetry of sim:
    #   sel[i, j] = sim[i, j] >= max(thr[i], thr[j])
    sel = sim >= jnp.maximum(thr, jnp.transpose(thr))

    # ---- masked softmax numerator, weighted sum of queries ----
    logits = jnp.where(sel, sim, NEG)
    m = jnp.max(logits, axis=-1, keepdims=True)
    e = jnp.where(sel, jnp.exp(logits - m), 0.0)
    # Softmax denominator dropped on purpose: the per-row positive scale
    # cancels (up to the +EPS term) in the rsqrt normalization of `adapted`.
    adapted = jnp.dot(e.astype(mxu_dtype), query_m,
                      preferred_element_type=jnp.float32)          # (NQp, Dp)

    # ---- cosine(adapted, proto) scaled by tao ----
    # tao folded into the (NQp,1) normalization scale so the final MXU result
    # goes straight to the lane-dense store (no full-output VPU pass).
    an = adapted * (tao_ref[0] * lax.rsqrt(
        jnp.sum(adapted * adapted, -1, keepdims=True) + EPS))
    an_m = an.astype(mxu_dtype)

    # Prototype normalization only on the live sublane tile(s); rows >= n are
    # exact zeros and the padded output columns are discarded by the wrapper.
    n_pad = proto.shape[0]
    p_live = proto[:n_live, :]                                     # static slice
    inv_live = lax.rsqrt(jnp.sum(p_live * p_live, -1, keepdims=True) + EPS)
    pn_live = p_live * inv_live
    if n_pad > n_live:
        pn = jnp.concatenate(
            [pn_live,
             jnp.zeros((n_pad - n_live, p_live.shape[1]), jnp.float32)],
            axis=0)                                                # (Np, Dp)
    else:
        pn = pn_live
    pn_m = pn.astype(mxu_dtype)

    # ---- lane-dense (NQp, Np) store straight from the MXU ----
    o_ref[...] = lax.dot_general(an_m, pn_m, (((1,), (1,)), ((), ())),
                                 preferred_element_type=jnp.float32)


class QueryClusterParams(NamedTuple):
    w_pad: jax.Array      # (F, D_pad)   mxu_dtype
    b_pad: jax.Array      # (1, D_pad)   f32
    avg: jax.Array        # (N_pad, B)   mxu_dtype
    qsel: jax.Array       # (NQ_pad, B)  mxu_dtype
    n: int
    kshot: int
    qshot: int
    mxu_dtype: object


def prepare_query_cluster_params(w_enc, b_enc, n, kshot, qshot,
                                 *, mxu_dtype=jnp.bfloat16):
    """Pad + cast the episode-invariant operands ONCE (hoisted out of forward).

    bf16 MXU operands are profitable on v5e/v6e/v7x alike (all MXUs take
    bf16); bias / accumulation / VPU / EUP math stays f32.
    """
    F, D = w_enc.shape
    B = n * (kshot + qshot)
    NQ = n * qshot
    assert NQ >= KTOP, "need at least k=9 queries for topk"

    D_pad = _round_up(D, LANE)     # lane-dense feature dim (exact zero pad)
    N_pad = _round_up(n, LANE)     # lane-dense output width (zero proto rows)
    NQ_pad = _round_up(NQ, SUB)    # whole sublane tiles for sim / output rows

    w_pad = jnp.pad(jnp.asarray(w_enc, jnp.float32),
                    ((0, 0), (0, D_pad - D))).astype(mxu_dtype)
    b_pad = jnp.pad(jnp.asarray(b_enc, jnp.float32).reshape(1, D),
                    ((0, 0), (0, D_pad - D)))

    # Static selection / averaging matrices (exact 0/1 and 1/k entries):
    #   proto = avg  @ feat    (rows >= n are zero -> zero prototypes)
    #   query = qsel @ feat    (rows >= NQ are zero -> zero padded queries)
    avg = np.zeros((N_pad, B), np.float32)
    qsel = np.zeros((NQ_pad, B), np.float32)
    for i in range(n):
        base = i * (kshot + qshot)
        avg[i, base:base + kshot] = 1.0 / kshot
        for j in range(qshot):
            qsel[i * qshot + j, base + kshot + j] = 1.0

    return QueryClusterParams(w_pad, b_pad,
                              jnp.asarray(avg, dtype=mxu_dtype),
                              jnp.asarray(qsel, dtype=mxu_dtype),
                              n, kshot, qshot, mxu_dtype)


def query_cluster_forward(x, tao, params: QueryClusterParams):
    """Forward pass.  x: (B, C, H, W) for one episode, or (E, B, C, H, W) for
    E episodes batched into a single pallas_call (grid over episodes)."""
    n, kshot, qshot = params.n, params.kshot, params.qshot
    mxu_dtype = params.mxu_dtype
    F, D_pad = params.w_pad.shape
    N_pad, B = params.avg.shape
    NQ_pad = params.qsel.shape[0]
    NQ = n * qshot
    n_live = min(_round_up(n, SUB), N_pad)

    single = (x.ndim == 4)
    if single:
        x = x[None]
    E = x.shape[0]
    assert x.shape[1] == B
    x_flat = x.reshape(E, B, -1).astype(mxu_dtype)
    assert x_flat.shape[-1] == F

    # Dtype-aware advisory cost estimate.
    isz = jnp.dtype(mxu_dtype).itemsize
    flops = int(E * (2 * B * F * D_pad                 # encoder
                     + 2 * (N_pad + NQ_pad) * B * D_pad  # proto / query select
                     + 4 * NQ_pad * NQ_pad * D_pad       # sim + adapted
                     + 2 * NQ_pad * N_pad * D_pad))      # adapted x proto
    transcendentals = int(E * (NQ_pad * NQ_pad + 2 * NQ_pad + n_live))
    bytes_accessed = int(E * B * F * isz + F * D_pad * isz + D_pad * 4
                         + N_pad * B * isz + NQ_pad * B * isz + 4
                         + E * NQ_pad * N_pad * 4)

    out_pad = pl.pallas_call(
        functools.partial(fused_query_cluster_kernel, mxu_dtype, NQ, n_live),
        grid=(E,),
        out_shape=jax.ShapeDtypeStruct((E, NQ_pad, N_pad), jnp.float32),
        in_specs=[
            # per-episode activations
            pl.BlockSpec((None, B, F), lambda e: (e, 0, 0)),
            # episode-invariant operands: constant block index -> stay resident
            pl.BlockSpec((F, D_pad), lambda e: (0, 0)),
            pl.BlockSpec((1, D_pad), lambda e: (0, 0)),
            pl.BlockSpec((N_pad, B), lambda e: (0, 0)),
            pl.BlockSpec((NQ_pad, B), lambda e: (0, 0)),
            pl.BlockSpec(memory_space=pltpu.MemorySpace.SMEM),   # tao scalar
        ],
        out_specs=pl.BlockSpec((None, NQ_pad, N_pad), lambda e: (e, 0, 0)),
        compiler_params=pltpu.CompilerParams(
            # episode axis is embarrassingly parallel -> v7x 2nd TC gets work;
            # no-op on single-core v5e/v6e.
            dimension_semantics=("parallel",),
            vmem_limit_bytes=32 * 1024 * 1024,
        ),
        cost_estimate=pl.CostEstimate(flops=flops,
                                      transcendentals=transcendentals,
                                      bytes_accessed=bytes_accessed),
    )(x_flat, params.w_pad, params.b_pad, params.avg, params.qsel,
      jnp.asarray(tao, jnp.float32).reshape(1))

    out = out_pad[:, :NQ, :n]
    return out[0] if single else out


def _ref_forward(x, w_enc, b_enc, tao, n, kshot, qshot):
    """Pure-JAX f32 reference of the same forward pass (correctness check)."""
    B = x.shape[0]
    D = w_enc.shape[1]
    feat = jnp.maximum(x.reshape(B, -1) @ w_enc + b_enc, 0.0)
    feat = feat.reshape(n, kshot + qshot, D)
    support, query = feat[:, :kshot], feat[:, kshot:]
    query = query.reshape(n * qshot, D)
    proto = support.mean(1)

    qn = query / jnp.sqrt(jnp.sum(query * query, -1, keepdims=True) + EPS)
    sim = qn @ qn.T
    _, idx = jax.lax.top_k(sim, KTOP)
    mask = jnp.zeros_like(sim).at[jnp.arange(sim.shape[0])[:, None], idx].set(1.0)
    mask = mask + mask.T
    sel = mask == 2.0
    logits = jnp.where(sel, sim, -jnp.inf)
    w = jax.nn.softmax(logits, axis=-1)
    adapted = w @ query
    an = adapted / jnp.sqrt(jnp.sum(adapted * adapted, -1, keepdims=True) + EPS)
    pn = proto / jnp.sqrt(jnp.sum(proto * proto, -1, keepdims=True) + EPS)
    return tao * (an @ pn.T)


if __name__ == "__main__":
    # small few-shot episode: n=2 ways, k=5 shots, q=5 queries -> NQ = 10 >= 9
    n, kshot, qshot = 2, 5, 5
    C, H, W = 3, 16, 16
    D = 32
    B = n * (kshot + qshot)            # 20 images per episode

    key = jax.random.PRNGKey(0)
    kx, kw, kb = jax.random.split(key, 3)
    x = jax.random.normal(kx, (B, C, H, W), dtype=jnp.float32)          # NCHW
    w_enc = jax.random.normal(kw, (C * H * W, D), dtype=jnp.float32) * 0.02
    b_enc = jax.random.normal(kb, (D,), dtype=jnp.float32) * 0.01
    tao = jnp.float32(10.0)            # nn.Parameter(torch.tensor(10.0))

    ref = _ref_forward(x, w_enc, b_enc, tao, n, kshot, qshot)

    # ---- full-precision MXU path: strict correctness check ----
    params_f32 = prepare_query_cluster_params(w_enc, b_enc, n, kshot, qshot,
                                              mxu_dtype=jnp.float32)
    out = jax.block_until_ready(query_cluster_forward(x, tao, params_f32))
    assert out.shape == (n * qshot, n), out.shape
    assert jnp.allclose(out, ref, rtol=1e-4, atol=1e-4), (
        f"mismatch: max abs err = {jnp.max(jnp.abs(out - ref))}"
    )

    # ---- default bf16-MXU path (perf config on v5e/v6e/v7x): loose sanity ----
    params_bf = prepare_query_cluster_params(w_enc, b_enc, n, kshot, qshot)
    out_bf = jax.block_until_ready(query_cluster_forward(x, tao, params_bf))
    assert out_bf.shape == (n * qshot, n), out_bf.shape
    assert bool(jnp.all(jnp.isfinite(out_bf)))
    assert jnp.allclose(out_bf, ref, rtol=0.0, atol=1.0), (
        f"bf16 sanity mismatch: max abs err = {jnp.max(jnp.abs(out_bf - ref))}"
    )

    # ---- batched episodes: E episodes in ONE pallas_call (grid over E) ----
    E = 3
    xkeys = jax.random.split(jax.random.PRNGKey(1), E)
    xb = jnp.stack([jax.random.normal(k, (B, C, H, W), dtype=jnp.float32)
                    for k in xkeys])
    out_b = jax.block_until_ready(query_cluster_forward(xb, tao, params_f32))
    assert out_b.shape == (E, n * qshot, n), out_b.shape
    ref_b = jnp.stack([_ref_forward(xb[e], w_enc, b_enc, tao, n, kshot, qshot)
                       for e in range(E)])
    assert jnp.allclose(out_b, ref_b, rtol=1e-4, atol=1e-4), (
        f"batched mismatch: max abs err = {jnp.max(jnp.abs(out_b - ref_b))}"
    )

    print("KERNEL_OK")
</pallas_src>

<mosaic_0001>
module attributes {stable_mosaic.version = 11 : i64} {
  func.func @fused_query_cluster_kernel(%arg0: i32, %arg1: memref<1x20x768xf32, #tpu.memory_space<vmem>>, %arg2: memref<768x128xf32, #tpu.memory_space<vmem>>, %arg3: memref<1x128xf32, #tpu.memory_space<vmem>>, %arg4: memref<128x20xf32, #tpu.memory_space<vmem>>, %arg5: memref<16x20xf32, #tpu.memory_space<vmem>>, %arg6: memref<1xf32, #tpu.memory_space<smem>>, %arg7: memref<1x16x128xf32, #tpu.memory_space<vmem>>) attributes {dimension_semantics = [#tpu.dimension_semantics<parallel>], iteration_bounds = array<i64: 1>, scalar_prefetch = 0 : i64, scratch_operands = 0 : i64, tpu.core_type = #tpu.core_type<tc>, window_params = [{transform_indices = @transform_0, window_bounds = array<i64: 1, 20, 768>}, {pipeline_mode = #tpu.pipeline_mode<synchronous>, transform_indices = @transform_1, window_bounds = array<i64: 768, 128>}, {pipeline_mode = #tpu.pipeline_mode<synchronous>, transform_indices = @transform_2, window_bounds = array<i64: 1, 128>}, {pipeline_mode = #tpu.pipeline_mode<synchronous>, transform_indices = @transform_3, window_bounds = array<i64: 128, 20>}, {pipeline_mode = #tpu.pipeline_mode<synchronous>, transform_indices = @transform_4, window_bounds = array<i64: 16, 20>}, {transform_indices = @transform_5, window_bounds = array<i64: 1>}, {transform_indices = @transform_6, window_bounds = array<i64: 1, 16, 128>}]} {
    %c0 = arith.constant 0 : index
    %c0_0 = arith.constant 0 : index
    %c0_1 = arith.constant 0 : index
    %0 = vector.load %arg1[%c0, %c0_0, %c0_1] : memref<1x20x768xf32, #tpu.memory_space<vmem>>, vector<1x20x768xf32>
    %1 = vector.shape_cast %0 : vector<1x20x768xf32> to vector<20x768xf32>
    %c0_2 = arith.constant 0 : index
    %c0_3 = arith.constant 0 : index
    %2 = vector.load %arg2[%c0_2, %c0_3] : memref<768x128xf32, #tpu.memory_space<vmem>>, vector<768x128xf32>
    %cst = arith.constant dense<0.000000e+00> : vector<20x128xf32>
    %3 = tpu.matmul %1, %2, %cst {dimension_numbers = #tpu.dot_dimension_numbers<[1], [0], [0], [1], [0, 0, 1, 1], [], []>} : vector<20x768xf32>, vector<768x128xf32>, vector<20x128xf32> -> vector<20x128xf32>
    %c0_4 = arith.constant 0 : index
    %c0_5 = arith.constant 0 : index
    %4 = vector.load %arg3[%c0_4, %c0_5] : memref<1x128xf32, #tpu.memory_space<vmem>>, vector<1x128xf32>
    %5 = vector.broadcast %4 : vector<1x128xf32> to vector<20x128xf32>
    %6 = arith.addf %3, %5 : vector<20x128xf32>
    %cst_6 = arith.constant 0.000000e+00 : f32
    %7 = vector.broadcast %cst_6 : f32 to vector<20x128xf32>
    %8 = arith.maximumf %6, %7 : vector<20x128xf32>
    %c0_7 = arith.constant 0 : index
    %c0_8 = arith.constant 0 : index
    %9 = vector.load %arg4[%c0_7, %c0_8] : memref<128x20xf32, #tpu.memory_space<vmem>>, vector<128x20xf32>
    %cst_9 = arith.constant dense<0.000000e+00> : vector<128x128xf32>
    %10 = tpu.matmul %9, %8, %cst_9 {dimension_numbers = #tpu.dot_dimension_numbers<[1], [0], [0], [1], [0, 0, 1, 1], [], []>} : vector<128x20xf32>, vector<20x128xf32>, vector<128x128xf32> -> vector<128x128xf32>
    %c0_10 = arith.constant 0 : index
    %c0_11 = arith.constant 0 : index
    %11 = vector.load %arg5[%c0_10, %c0_11] : memref<16x20xf32, #tpu.memory_space<vmem>>, vector<16x20xf32>
    %cst_12 = arith.constant dense<0.000000e+00> : vector<16x128xf32>
    %12 = tpu.matmul %11, %8, %cst_12 {dimension_numbers = #tpu.dot_dimension_numbers<[1], [0], [0], [1], [0, 0, 1, 1], [], []>} : vector<16x20xf32>, vector<20x128xf32>, vector<16x128xf32> -> vector<16x128xf32>
    %13 = arith.mulf %12, %12 : vector<16x128xf32>
    %cst_13 = arith.constant dense<0.000000e+00> : vector<16xf32>
    %14 = vector.multi_reduction <add>, %13, %cst_13 [1] : vector<16x128xf32> to vector<16xf32>
    %15 = vector.shape_cast %14 : vector<16xf32> to vector<16x1xf32>
    %cst_14 = arith.constant 9.99999993E-9 : f32
    %16 = vector.broadcast %cst_14 : f32 to vector<16x1xf32>
    %17 = arith.addf %15, %16 : vector<16x1xf32>
    %18 = math.rsqrt %17 : vector<16x1xf32>
    %19 = vector.broadcast %18 : vector<16x1xf32> to vector<16x128xf32>
    %20 = arith.mulf %12, %19 : vector<16x128xf32>
    %cst_15 = arith.constant dense<0.000000e+00> : vector<16x16xf32>
    %21 = tpu.matmul %20, %20, %cst_15 {dimension_numbers = #tpu.dot_dimension_numbers<[1], [1], [0], [0], [0, 0, 1, 0], [], []>} : vector<16x128xf32>, vector<16x128xf32>, vector<16x16xf32> -> vector<16x16xf32>
    %22 = tpu.iota {dimensions = array<i32: 1>} : vector<1x16xi32>
    %c10_i32 = arith.constant 10 : i32
    %23 = vector.broadcast %c10_i32 : i32 to vector<1x16xi32>
    %24 = arith.cmpi slt, %22, %23 : vector<1x16xi32>
    %cst_16 = arith.constant -1.000000e+30 : f32
    %25 = vector.shape_cast %24 : vector<1x16xi1> to vector<1x16xi1>
    %26 = vector.broadcast %25 : vector<1x16xi1> to vector<16x16xi1>
    %27 = vector.broadcast %cst_16 : f32 to vector<16x16xf32>
    %28 = arith.select %26, %21, %27 : vector<16x16xi1>, vector<16x16xf32>
    %cst_17 = arith.constant dense<0xFF800000> : vector<16xf32>
    %29 = vector.multi_reduction <maximumf>, %28, %cst_17 [1] : vector<16x16xf32> to vector<16xf32>
    %30 = vector.shape_cast %29 : vector<16xf32> to vector<16x1xf32>
    %31 = vector.broadcast %30 : vector<16x1xf32> to vector<16x16xf32>
    %32 = arith.cmpf oge, %28, %31 : vector<16x16xf32>
    %cst_18 = arith.constant -1.000000e+30 : f32
    %33 = vector.broadcast %cst_18 : f32 to vector<16x16xf32>
    %34 = arith.select %32, %33, %28 : vector<16x16xi1>, vector<16x16xf32>
    %cst_19 = arith.constant dense<0xFF800000> : vector<16xf32>
    %35 = vector.multi_reduction <maximumf>, %34, %cst_19 [1] : vector<16x16xf32> to vector<16xf32>
    %36 = vector.shape_cast %35 : vector<16xf32> to vector<16x1xf32>
    %37 = vector.broadcast %36 : vector<16x1xf32> to vector<16x16xf32>
    %38 = arith.cmpf oge, %34, %37 : vector<16x16xf32>
    %cst_20 = arith.constant -1.000000e+30 : f32
    %39 = vector.broadcast %cst_20 : f32 to vector<16x16xf32>
    %40 = arith.select %38, %39, %34 : vector<16x16xi1>, vector<16x16xf32>
    %cst_21 = arith.constant dense<0xFF800000> : vector<16xf32>
    %41 = vector.multi_reduction <maximumf>, %40, %cst_21 [1] : vector<16x16xf32> to vector<16xf32>
    %42 = vector.shape_cast %41 : vector<16xf32> to vector<16x1xf32>
    %43 = vector.broadcast %42 : vector<16x1xf32> to vector<16x16xf32>
    %44 = arith.cmpf oge, %40, %43 : vector<16x16xf32>
    %cst_22 = arith.constant -1.000000e+30 : f32
    %45 = vector.broadcast %cst_22 : f32 to vector<16x16xf32>
    %46 = arith.select %44, %45, %40 : vector<16x16xi1>, vector<16x16xf32>
    %cst_23 = arith.constant dense<0xFF800000> : vector<16xf32>
    %47 = vector.multi_reduction <maximumf>, %46, %cst_23 [1] : vector<16x16xf32> to vector<16xf32>
    %48 = vector.shape_cast %47 : vector<16xf32> to vector<16x1xf32>
    %49 = vector.broadcast %48 : vector<16x1xf32> to vector<16x16xf32>
    %50 = arith.cmpf oge, %46, %49 : vector<16x16xf32>
    %cst_24 = arith.constant -1.000000e+30 : f32
    %51 = vector.broadcast %cst_24 : f32 to vector<16x16xf32>
    %52 = arith.select %50, %51, %46 : vector<16x16xi1>, vector<16x16xf32>
    %cst_25 = arith.constant dense<0xFF800000> : vector<16xf32>
    %53 = vector.multi_reduction <maximumf>, %52, %cst_25 [1] : vector<16x16xf32> to vector<16xf32>
    %54 = vector.shape_cast %53 : vector<16xf32> to vector<16x1xf32>
    %55 = vector.broadcast %54 : vector<16x1xf32> to vector<16x16xf32>
    %56 = arith.cmpf oge, %52, %55 : vector<16x16xf32>
    %cst_26 = arith.constant -1.000000e+30 : f32
    %57 = vector.broadcast %cst_26 : f32 to vector<16x16xf32>
    %58 = arith.select %56, %57, %52 : vector<16x16xi1>, vector<16x16xf32>
    %cst_27 = arith.constant dense<0xFF800000> : vector<16xf32>
    %59 = vector.multi_reduction <maximumf>, %58, %cst_27 [1] : vector<16x16xf32> to vector<16xf32>
    %60 = vector.shape_cast %59 : vector<16xf32> to vector<16x1xf32>
    %61 = vector.broadcast %60 : vector<16x1xf32> to vector<16x16xf32>
    %62 = arith.cmpf oge, %58, %61 : vector<16x16xf32>
    %cst_28 = arith.constant -1.000000e+30 : f32
    %63 = vector.broadcast %cst_28 : f32 to vector<16x16xf32>
    %64 = arith.select %62, %63, %58 : vector<16x16xi1>, vector<16x16xf32>
    %cst_29 = arith.constant dense<0xFF800000> : vector<16xf32>
    %65 = vector.multi_reduction <maximumf>, %64, %cst_29 [1] : vector<16x16xf32> to vector<16xf32>
    %66 = vector.shape_cast %65 : vector<16xf32> to vector<16x1xf32>
    %67 = vector.broadcast %66 : vector<16x1xf32> to vector<16x16xf32>
    %68 = arith.cmpf oge, %64, %67 : vector<16x16xf32>
    %cst_30 = arith.constant -1.000000e+30 : f32
    %69 = vector.broadcast %cst_30 : f32 to vector<16x16xf32>
    %70 = arith.select %68, %69, %64 : vector<16x16xi1>, vector<16x16xf32>
    %cst_31 = arith.constant dense<0xFF800000> : vector<16xf32>
    %71 = vector.multi_reduction <maximumf>, %70, %cst_31 [1] : vector<16x16xf32> to vector<16xf32>
    %72 = vector.shape_cast %71 : vector<16xf32> to vector<16x1xf32>
    %73 = vector.broadcast %72 : vector<16x1xf32> to vector<16x16xf32>
    %74 = arith.cmpf oge, %70, %73 : vector<16x16xf32>
    %cst_32 = arith.constant -1.000000e+30 : f32
    %75 = vector.broadcast %cst_32 : f32 to vector<16x16xf32>
    %76 = arith.select %74, %75, %70 : vector<16x16xi1>, vector<16x16xf32>
    %cst_33 = arith.constant dense<0xFF800000> : vector<16xf32>
    %77 = vector.multi_reduction <maximumf>, %76, %cst_33 [1] : vector<16x16xf32> to vector<16xf32>
    %78 = vector.shape_cast %77 : vector<16xf32> to vector<16x1xf32>
    %79 = tpu.transpose %78, [1, 0] : vector<16x1xf32> -> vector<1x16xf32>
    %80 = vector.broadcast %78 : vector<16x1xf32> to vector<16x16xf32>
    %81 = vector.broadcast %79 : vector<1x16xf32> to vector<16x16xf32>
    %82 = arith.maximumf %80, %81 : vector<16x16xf32>
    %83 = arith.cmpf oge, %28, %82 : vector<16x16xf32>
    %cst_34 = arith.constant -1.000000e+30 : f32
    %84 = vector.broadcast %cst_34 : f32 to vector<16x16xf32>
    %85 = arith.select %83, %28, %84 : vector<16x16xi1>, vector<16x16xf32>
    %cst_35 = arith.constant dense<0xFF800000> : vector<16xf32>
    %86 = vector.multi_reduction <maximumf>, %85, %cst_35 [1] : vector<16x16xf32> to vector<16xf32>
    %87 = vector.shape_cast %86 : vector<16xf32> to vector<16x1xf32>
    %88 = vector.broadcast %87 : vector<16x1xf32> to vector<16x16xf32>
    %89 = arith.subf %85, %88 : vector<16x16xf32>
    %90 = math.exp %89 : vector<16x16xf32>
    %cst_36 = arith.constant 0.000000e+00 : f32
    %91 = vector.broadcast %cst_36 : f32 to vector<16x16xf32>
    %92 = arith.select %83, %90, %91 : vector<16x16xi1>, vector<16x16xf32>
    %cst_37 = arith.constant dense<0.000000e+00> : vector<16x128xf32>
    %93 = tpu.matmul %92, %12, %cst_37 {dimension_numbers = #tpu.dot_dimension_numbers<[1], [0], [0], [1], [0, 0, 1, 1], [], []>} : vector<16x16xf32>, vector<16x128xf32>, vector<16x128xf32> -> vector<16x128xf32>
    %c0_38 = arith.constant 0 : index
    %94 = memref.load %arg6[%c0_38] : memref<1xf32, #tpu.memory_space<smem>>
    %95 = arith.mulf %93, %93 : vector<16x128xf32>
    %cst_39 = arith.constant dense<0.000000e+00> : vector<16xf32>
    %96 = vector.multi_reduction <add>, %95, %cst_39 [1] : vector<16x128xf32> to vector<16xf32>
    %97 = vector.shape_cast %96 : vector<16xf32> to vector<16x1xf32>
    %cst_40 = arith.constant 9.99999993E-9 : f32
    %98 = vector.broadcast %cst_40 : f32 to vector<16x1xf32>
    %99 = arith.addf %97, %98 : vector<16x1xf32>
    %100 = math.rsqrt %99 : vector<16x1xf32>
    %101 = vector.broadcast %94 : f32 to vector<16x1xf32>
    %102 = arith.mulf %101, %100 : vector<16x1xf32>
    %103 = vector.broadcast %102 : vector<16x1xf32> to vector<16x128xf32>
    %104 = arith.mulf %93, %103 : vector<16x128xf32>
    %105 = vector.extract_strided_slice %10 {offsets = [0, 0], sizes = [8, 128], strides = [1, 1]} : vector<128x128xf32> to vector<8x128xf32>
    %106 = arith.mulf %105, %105 : vector<8x128xf32>
    %cst_41 = arith.constant dense<0.000000e+00> : vector<8xf32>
    %107 = vector.multi_reduction <add>, %106, %cst_41 [1] : vector<8x128xf32> to vector<8xf32>
    %108 = vector.shape_cast %107 : vector<8xf32> to vector<8x1xf32>
    %cst_42 = arith.constant 9.99999993E-9 : f32
    %109 = vector.broadcast %cst_42 : f32 to vector<8x1xf32>
    %110 = arith.addf %108, %109 : vector<8x1xf32>
    %111 = math.rsqrt %110 : vector<8x1xf32>
    %112 = vector.broadcast %111 : vector<8x1xf32> to vector<8x128xf32>
    %113 = arith.mulf %105, %112 : vector<8x128xf32>
    %cst_43 = arith.constant 0.000000e+00 : f32
    %114 = vector.broadcast %cst_43 : f32 to vector<120x128xf32>
    %115 = tpu.concatenate %113, %114 in 0 : vector<8x128xf32>, vector<120x128xf32> -> vector<128x128xf32>
    %cst_44 = arith.constant dense<0.000000e+00> : vector<16x128xf32>
    %116 = tpu.matmul %104, %115, %cst_44 {dimension_numbers = #tpu.dot_dimension_numbers<[1], [1], [0], [0], [0, 0, 1, 0], [], []>} : vector<16x128xf32>, vector<128x128xf32>, vector<16x128xf32> -> vector<16x128xf32>
    %c0_45 = arith.constant 0 : index
    %c0_46 = arith.constant 0 : index
    %c0_47 = arith.constant 0 : index
    %117 = vector.load %arg7[%c0_45, %c0_46, %c0_47] : memref<1x16x128xf32, #tpu.memory_space<vmem>>, vector<1x16x128xf32>
    %118 = vector.shape_cast %117 : vector<1x16x128xf32> to vector<16x128xf32>
    %119 = vector.shape_cast %116 : vector<16x128xf32> to vector<1x16x128xf32>
    tpu.vector_store %arg7[%c0_45, %c0_46, %c0_47], %119 {strides = array<i32>} : memref<1x16x128xf32, #tpu.memory_space<vmem>>, vector<1x16x128xf32>,
    return
  }
  func.func @transform_0(%arg0: i32) -> (i32, i32, i32) {
    %c0_i32 = arith.constant 0 : i32
    %c0_i32_0 = arith.constant 0 : i32
    %c0_i32_1 = arith.constant 0 : i32
    return %arg0, %c0_i32, %c0_i32_0 : i32, i32, i32
  }
  func.func @transform_1(%arg0: i32) -> (i32, i32) {
    %c0_i32 = arith.constant 0 : i32
    %c0_i32_0 = arith.constant 0 : i32
    %c0_i32_1 = arith.constant 0 : i32
    return %c0_i32, %c0_i32_0 : i32, i32
  }
  func.func @transform_2(%arg0: i32) -> (i32, i32) {
    %c0_i32 = arith.constant 0 : i32
    %c0_i32_0 = arith.constant 0 : i32
    %c0_i32_1 = arith.constant 0 : i32
    return %c0_i32, %c0_i32_0 : i32, i32
  }
  func.func @transform_3(%arg0: i32) -> (i32, i32) {
    %c0_i32 = arith.constant 0 : i32
    %c0_i32_0 = arith.constant 0 : i32
    %c0_i32_1 = arith.constant 0 : i32
    return %c0_i32, %c0_i32_0 : i32, i32
  }
  func.func @transform_4(%arg0: i32) -> (i32, i32) {
    %c0_i32 = arith.constant 0 : i32
    %c0_i32_0 = arith.constant 0 : i32
    %c0_i32_1 = arith.constant 0 : i32
    return %c0_i32, %c0_i32_0 : i32, i32
  }
  func.func @transform_5(%arg0: i32) -> i32 {
    %c0_i32 = arith.constant 0 : i32
    %c0_i32_0 = arith.constant 0 : i32
    return %c0_i32 : i32
  }
  func.func @transform_6(%arg0: i32) -> (i32, i32, i32) {
    %c0_i32 = arith.constant 0 : i32
    %c0_i32_0 = arith.constant 0 : i32
    %c0_i32_1 = arith.constant 0 : i32
    return %arg0, %c0_i32, %c0_i32_0 : i32, i32, i32
  }
}

</mosaic_0001>

<llo_original>
// kernel: tpu_custom_call.1
$region0: #{tpu_custom_call.1}
  #allocation0 [shape = 'u32[]', space=smem, size = 0x4, offset = 0x4, fixed_abs, tag = 'smem constant byte address 0x4 - core index']
  #allocation1 [shape = 'u32[144,128]{1,0:T(1,128)}', space=vmem, size = 0x12000, scoped, tag = 'internal scratch']
  #allocation2 [shape = 'f32[1]{0:T(128)S(6)}', space=smem, size = 0x200, scoped, tag = 'scoped memory for tpu_custom_call.1']
  %s0 = inlined_call_operand.vmem [shape: f32[1,20,768], index: 0, kind: input, shape index: {}]
  %s1 = inlined_call_operand.hbm [shape: f32[768,128], index: 1, kind: input, shape index: {}]
  %s2 = inlined_call_operand.vmem [shape: f32[1,128], index: 2, kind: input, shape index: {}]
  %s3 = inlined_call_operand.vmem [shape: f32[128,20], index: 3, kind: input, shape index: {}]
  %s4 = inlined_call_operand.vmem [shape: f32[16,20], index: 4, kind: input, shape index: {}]
  %s5 = inlined_call_operand.<no memory space> [shape: f32[1], index: 5, kind: input, shape index: {}]
  %s6 = inlined_call_operand.hbm [shape: f32[1,16,128], index: 6, kind: output, shape index: {}]
  %s7 = sld [smem:[#allocation0]]
  $region38: #{tpu_custom_call.1} parent=0
    _
  %s9 = ssub.s32 1, %s7
  %s10 = scalar_select 0, %s9, %s7
  %11 = sst [smem:[#allocation2]] %s5
  $region1: #{tpu_custom_call.1} parent=0
    #allocation3 [shape = 'u8[393216]{0}', space=vmem, size = 0x60000, scoped, tag = 'input window, operand 1, single buffered']
    #allocation4 [shape = 's32[1]{0}', space=sflag, size = 0x4, scoped, tag = 'scoped memory for tpu_custom_call.1']
    #allocation5 [shape = 's32[1]{0}', space=sflag, size = 0x4, scoped, tag = 'scoped memory for tpu_custom_call.1']
    #allocation6 [shape = 'u8[8192]{0}', space=vmem, size = 0x2000, scoped, tag = 'output window, operand 0, single buffered']
    %12 = vsyncpa [#allocation4], 0
    %13 = vsyncpa [#allocation5], 0
    // Predicated region
    $region2: #{tpu_custom_call.1} parent=1 // pred_check
      _
    $region3: #{tpu_custom_call.1} parent=1 // pred_check_branch
      %15 = sbr.rel (0) target = $region5
    $region4: #{tpu_custom_call.1} parent=1 // pred_region
      _
    $region5: #{tpu_custom_call.1} parent=1 // pred_fallthru
      _
    // Predicated region
    $region6: #{tpu_custom_call.1} parent=1 // pred_check
      _
    $region7: #{tpu_custom_call.1} parent=1 // pred_check_branch
      %17 = sbr.rel (0) target = $region9
    $region8: #{tpu_custom_call.1} parent=1 // pred_region
      %s19 = ssub.s32 12288, 12288
      %20 = vsyncadd [#allocation4], %s19
      %s21 = sshll.u32 [#allocation3], 4
      %s22 = int_to_ptr.vmem [resolvable:$true] %s21
      %27 = dma.hbm_to_vmem [thread:$0]  %s1, 12288, %s22, [#allocation4], 128, 128, 8
    $region9: #{tpu_custom_call.1} parent=1 // pred_fallthru
      _
    // Predicated region
    $region10: #{tpu_custom_call.1} parent=1 // pred_check
      _
    $region11: #{tpu_custom_call.1} parent=1 // pred_check_branch
      %29 = sbr.rel (0) target = $region13
    $region12: #{tpu_custom_call.1} parent=1 // pred_region
      _
    $region13: #{tpu_custom_call.1} parent=1 // pred_fallthru
      _
    // Predicated region
    $region14: #{tpu_custom_call.1} parent=1 // pred_check
      _
    $region15: #{tpu_custom_call.1} parent=1 // pred_check_branch
      %31 = sbr.rel (0) target = $region17
    $region16: #{tpu_custom_call.1} parent=1 // pred_region
      _
    $region17: #{tpu_custom_call.1} parent=1 // pred_fallthru
      _
    // Predicated region
    $region18: #{tpu_custom_call.1} parent=1 // pred_check
      _
    $region19: #{tpu_custom_call.1} parent=1 // pred_check_branch
      %33 = sbr.rel (0) target = $region21
    $region20: #{tpu_custom_call.1} parent=1 // pred_region
      _
    $region21: #{tpu_custom_call.1} parent=1 // pred_fallthru
      _
    // Predicated region
    $region22: #{tpu_custom_call.1} parent=1 // pred_check
      _
    $region23: #{tpu_custom_call.1} parent=1 // pred_check_branch
      %35 = sbr.rel (0) target = $region25
    $region24: #{tpu_custom_call.1} parent=1 // pred_region
      _
    $region25: #{tpu_custom_call.1} parent=1 // pred_fallthru
      _
    // Predicated region
    $region26: #{tpu_custom_call.1} parent=1 // pred_check
      _
    $region27: #{tpu_custom_call.1} parent=1 // pred_check_branch
      %37 = sbr.rel (0) target = $region29
    $region28: #{tpu_custom_call.1} parent=1 // pred_region
      %38 = dma.done [#allocation4], 12288
    $region29: #{tpu_custom_call.1} parent=1 // pred_fallthru
      _
    %v39 = vld [vmem:[%s0] sm:$0xff]
    %v40 = vld [vmem:[%s0 + $0x8] sm:$0xff]
    %v41 = vld [vmem:[%s0 + $0x10] sm:$0xff]
    %v42 = vld [vmem:[%s0 + $0x18] sm:$0xff]
    %v43 = vld [vmem:[%s0 + $0x20] sm:$0xff]
    %v44 = vld [vmem:[%s0 + $0x28] sm:$0xff]
    %v45 = vld [vmem:[%s0 + $0x30] sm:$0xff]
    %v46 = vld [vmem:[%s0 + $0x38] sm:$0xff]
    %v47 = vld [vmem:[%s0 + $0x40] sm:$0xff]
    %v48 = vld [vmem:[%s0 + $0x48] sm:$0xff]
    %v49 = vld [vmem:[%s0 + $0x50] sm:$0xff]
    %v50 = vld [vmem:[%s0 + $0x58] sm:$0xff]
    %v51 = vld [vmem:[%s0 + $0x60] sm:$0xf]
    %v52 = vld [vmem:[%s0 + $0x68] sm:$0xf]
    %v53 = vld [vmem:[%s0 + $0x70] sm:$0xf]
    %v54 = vld [vmem:[%s0 + $0x78] sm:$0xf]
    %v55 = vld [vmem:[%s0 + $0x80] sm:$0xf]
    %v56 = vld [vmem:[%s0 + $0x88] sm:$0xf]
    %v57 = vld [vmem:[#allocation3] sm:$0xff]
    %v58 = vld [vmem:[#allocation3 + $0x8] sm:$0xff]
    %v59 = vld [vmem:[#allocation3 + $0x10] sm:$0xff]
    %v60 = vld [vmem:[#allocation3 + $0x18] sm:$0xff]
    %v61 = vld [vmem:[#allocation3 + $0x20] sm:$0xff]
    %v62 = vld [vmem:[#allocation3 + $0x28] sm:$0xff]
    %v63 = vld [vmem:[#allocation3 + $0x30] sm:$0xff]
    %v64 = vld [vmem:[#allocation3 + $0x38] sm:$0xff]
    %v65 = vld [vmem:[#allocation3 + $0x40] sm:$0xff]
    %v66 = vld [vmem:[#allocation3 + $0x48] sm:$0xff]
    %v67 = vld [vmem:[#allocation3 + $0x50] sm:$0xff]
    %v68 = vld [vmem:[#allocation3 + $0x58] sm:$0xff]
    %v69 = vld [vmem:[#allocation3 + $0x60] sm:$0xff]
    %v70 = vld [vmem:[#allocation3 + $0x68] sm:$0xff]
    %v71 = vld [vmem:[#allocation3 + $0x70] sm:$0xff]
    %v72 = vld [vmem:[#allocation3 + $0x78] sm:$0xff]
    %v73 = vld [vmem:[#allocation3 + $0x80] sm:$0xff]
    %v74 = vld [vmem:[#allocation3 + $0x88] sm:$0xff]
    %v75 = vld [vmem:[#allocation3 + $0x90] sm:$0xff]
    %v76 = vld [vmem:[#allocation3 + $0x98] sm:$0xff]
    %v77 = vld [vmem:[#allocation3 + $0xa0] sm:$0xff]
    %v78 = vld [vmem:[#allocation3 + $0xa8] sm:$0xff]
    %v79 = vld [vmem:[#allocation3 + $0xb0] sm:$0xff]
    %v80 = vld [vmem:[#allocation3 + $0xb8] sm:$0xff]
    %v81 = vld [vmem:[#allocation3 + $0xc0] sm:$0xff]
    %v82 = vld [vmem:[#allocation3 + $0xc8] sm:$0xff]
    %v83 = vld [vmem:[#allocation3 + $0xd0] sm:$0xff]
    %v84 = vld [vmem:[#allocation3 + $0xd8] sm:$0xff]
    %v85 = vld [vmem:[#allocation3 + $0xe0] sm:$0xff]
    %v86 = vld [vmem:[#allocation3 + $0xe8] sm:$0xff]
    %v87 = vld [vmem:[#allocation3 + $0xf0] sm:$0xff]
    %v88 = vld [vmem:[#allocation3 + $0xf8] sm:$0xff]
    %v89 = vld [vmem:[#allocation3 + $0x100] sm:$0xff]
    %v90 = vld [vmem:[#allocation3 + $0x108] sm:$0xff]
    %v91 = vld [vmem:[#allocation3 + $0x110] sm:$0xff]
    %v92 = vld [vmem:[#allocation3 + $0x118] sm:$0xff]
    %v93 = vld [vmem:[#allocation3 + $0x120] sm:$0xff]
    %v94 = vld [vmem:[#allocation3 + $0x128] sm:$0xff]
    %v95 = vld [vmem:[#allocation3 + $0x130] sm:$0xff]
    %v96 = vld [vmem:[#allocation3 + $0x138] sm:$0xff]
    %v97 = vld [vmem:[#allocation3 + $0x140] sm:$0xff]
    %v98 = vld [vmem:[#allocation3 + $0x148] sm:$0xff]
    %v99 = vld [vmem:[#allocation3 + $0x150] sm:$0xff]
    %v100 = vld [vmem:[#allocation3 + $0x158] sm:$0xff]
    %v101 = vld [vmem:[#allocation3 + $0x160] sm:$0xff]
    %v102 = vld [vmem:[#allocation3 + $0x168] sm:$0xff]
    %v103 = vld [vmem:[#allocation3 + $0x170] sm:$0xff]
    %v104 = vld [vmem:[#allocation3 + $0x178] sm:$0xff]
    %v105 = vld [vmem:[#allocation3 + $0x180] sm:$0xff]
    %v106 = vld [vmem:[#allocation3 + $0x188] sm:$0xff]
    %v107 = vld [vmem:[#allocation3 + $0x190] sm:$0xff]
    %v108 = vld [vmem:[#allocation3 + $0x198] sm:$0xff]
    %v109 = vld [vmem:[#allocation3 + $0x1a0] sm:$0xff]
    %v110 = vld [vmem:[#allocation3 + $0x1a8] sm:$0xff]
    %v111 = vld [vmem:[#allocation3 + $0x1b0] sm:$0xff]
    %v112 = vld [vmem:[#allocation3 + $0x1b8] sm:$0xff]
    %v113 = vld [vmem:[#allocation3 + $0x1c0] sm:$0xff]
    %v114 = vld [vmem:[#allocation3 + $0x1c8] sm:$0xff]
    %v115 = vld [vmem:[#allocation3 + $0x1d0] sm:$0xff]
    %v116 = vld [vmem:[#allocation3 + $0x1d8] sm:$0xff]
    %v117 = vld [vmem:[#allocation3 + $0x1e0] sm:$0xff]
    %v118 = vld [vmem:[#allocation3 + $0x1e8] sm:$0xff]
    %v119 = vld [vmem:[#allocation3 + $0x1f0] sm:$0xff]
    %v120 = vld [vmem:[#allocation3 + $0x1f8] sm:$0xff]
    %v121 = vld [vmem:[#allocation3 + $0x200] sm:$0xff]
    %v122 = vld [vmem:[#allocation3 + $0x208] sm:$0xff]
    %v123 = vld [vmem:[#allocation3 + $0x210] sm:$0xff]
    %v124 = vld [vmem:[#allocation3 + $0x218] sm:$0xff]
    %v125 = vld [vmem:[#allocation3 + $0x220] sm:$0xff]
    %v126 = vld [vmem:[#allocation3 + $0x228] sm:$0xff]
    %v127 = vld [vmem:[#allocation3 + $0x230] sm:$0xff]
    %v128 = vld [vmem:[#allocation3 + $0x238] sm:$0xff]
    %v129 = vld [vmem:[#allocation3 + $0x240] sm:$0xff]
    %v130 = vld [vmem:[#allocation3 + $0x248] sm:$0xff]
    %v131 = vld [vmem:[#allocation3 + $0x250] sm:$0xff]
    %v132 = vld [vmem:[#allocation3 + $0x258] sm:$0xff]
    %v133 = vld [vmem:[#allocation3 + $0x260] sm:$0xff]
    %v134 = vld [vmem:[#allocation3 + $0x268] sm:$0xff]
    %v135 = vld [vmem:[#allocation3 + $0x270] sm:$0xff]
    %v136 = vld [vmem:[#allocation3 + $0x278] sm:$0xff]
    %v137 = vld [vmem:[#allocation3 + $0x280] sm:$0xff]
    %v138 = vld [vmem:[#allocation3 + $0x288] sm:$0xff]
    %v139 = vld [vmem:[#allocation3 + $0x290] sm:$0xff]
    %v140 = vld [vmem:[#allocation3 + $0x298] sm:$0xff]
    %v141 = vld [vmem:[#allocation3 + $0x2a0] sm:$0xff]
    %v142 = vld [vmem:[#allocation3 + $0x2a8] sm:$0xff]
    %v143 = vld [vmem:[#allocation3 + $0x2b0] sm:$0xff]
    %v144 = vld [vmem:[#allocation3 + $0x2b8] sm:$0xff]
    %v145 = vld [vmem:[#allocation3 + $0x2c0] sm:$0xff]
    %v146 = vld [vmem:[#allocation3 + $0x2c8] sm:$0xff]
    %v147 = vld [vmem:[#allocation3 + $0x2d0] sm:$0xff]
    %v148 = vld [vmem:[#allocation3 + $0x2d8] sm:$0xff]
    %v149 = vld [vmem:[#allocation3 + $0x2e0] sm:$0xff]
    %v150 = vld [vmem:[#allocation3 + $0x2e8] sm:$0xff]
    %v151 = vld [vmem:[#allocation3 + $0x2f0] sm:$0xff]
    %v152 = vld [vmem:[#allocation3 + $0x2f8] sm:$0xff]
    %v153 = vld [vmem:[%s2] sm:$0x1]
    %v155 = vlaneseq
    %v156 = vshrl.u32 %v155, 7
    %v157 = vsub.s32 0, %v156
    %v158 = vrot.slane %v153, %v157
    %160 = vmatprep.subr.mxu0 0.0
    %161 = vmatpush1.msra.mxu0 %v57
    %162 = vmatprep.subr.mxu0 0.0
    %163 = vmatpush1.msra.mxu0 %v58
    %164 = vmatprep.subr.mxu0 0.0
    %165 = vmatpush1.msra.mxu0 %v59
    %166 = vmatprep.subr.mxu0 0.0
    %167 = vmatpush1.msra.mxu0 %v60
    %168 = vmatprep.subr.mxu0 0.0
    %169 = vmatpush1.msra.mxu0 %v61
    %170 = vmatprep.subr.mxu0 0.0
    %171 = vmatpush1.msra.mxu0 %v62
    %172 = vmatprep.subr.mxu0 0.0
    %173 = vmatpush1.msra.mxu0 %v63
    %174 = vmatprep.subr.mxu0 0.0
    %175 = vmatpush1.msra.mxu0 %v64
    %176 = vmatprep.subr.mxu0 0.0
    %177 = vmatpush1.msra.mxu0 %v65
    %178 = vmatprep.subr.mxu0 0.0
    %179 = vmatpush1.msra.mxu0 %v66
    %180 = vmatprep.subr.mxu0 0.0
    %181 = vmatpush1.msra.mxu0 %v67
    %182 = vmatprep.subr.mxu0 0.0
    %183 = vmatpush1.msra.mxu0 %v68
    %184 = vmatprep.subr.mxu0 0.0
    %185 = vmatpush1.msra.mxu0 %v69
    %186 = vmatprep.subr.mxu0 0.0
    %187 = vmatpush1.msra.mxu0 %v70
    %188 = vmatprep.subr.mxu0 0.0
    %189 = vmatpush1.msra.mxu0 %v71
    %190 = vmatprep.subr.mxu0 0.0
    %191 = vmatpush1.msra.mxu0 %v72
    %192 = vmatprep.subr.mxu0 0.0
    %193 = vmatpush1.msra.mxu0 %v73
    %194 = vmatprep.subr.mxu0 0.0
    %195 = vmatpush1.msra.mxu0 %v74
    %196 = vmatprep.subr.mxu0 0.0
    %197 = vmatpush1.msra.mxu0 %v75
    %198 = vmatprep.subr.mxu0 0.0
    %199 = vmatpush1.msra.mxu0 %v76
    %200 = vmatprep.subr.mxu0 0.0
    %201 = vmatpush1.msra.mxu0 %v77
    %202 = vmatprep.subr.mxu0 0.0
    %203 = vmatpush1.msra.mxu0 %v78
    %204 = vmatprep.subr.mxu0 0.0
    %205 = vmatpush1.msra.mxu0 %v79
    %206 = vmatprep.subr.mxu0 0.0
    %207 = vmatpush1.msra.mxu0 %v80
    %208 = vmatprep.subr.mxu0 0.0
    %209 = vmatpush1.msra.mxu0 %v81
    %210 = vmatprep.subr.mxu0 0.0
    %211 = vmatpush1.msra.mxu0 %v82
    %212 = vmatprep.subr.mxu0 0.0
    %213 = vmatpush1.msra.mxu0 %v83
    %214 = vmatprep.subr.mxu0 0.0
    %215 = vmatpush1.msra.mxu0 %v84
    %216 = vmatprep.subr.mxu0 0.0
    %217 = vmatpush1.msra.mxu0 %v85
    %218 = vmatprep.subr.mxu0 0.0
    %219 = vmatpush1.msra.mxu0 %v86
    %220 = vmatprep.subr.mxu0 0.0
    %221 = vmatpush1.msra.mxu0 %v87
    %222 = vmatprep.subr.mxu0 0.0
    %223 = vmatpush1.msra.mxu0 %v88
    %224 = vmatprep.mubr.f32.mxu0 %v40
    %225 = vmatmul.mubr.f32.gmra.mrb[0].mxu0 %v39
    %v226 = vpop.f32.mrb[0].mxu0
    %v227 = vadd.f32 %v158, %v226
    %v228 = vpop.f32.mrb[0].mxu0
    %229 = vmatprep.mubr.f32.mxu0 %v46
    %230 = vmatmul.mubr.f32.gmra.mrb[0].mxu0 %v45
    %v231 = vpop.f32.mrb[0].mxu0
    %v232 = vadd.f32 %v158, %v231
    %v233 = vpop.f32.mrb[0].mxu0
    %234 = vmatprep.mubr.f32.mxu0 %v52
    %235 = vmatmul.mubr.f32.gmra.mrb[0].mxu0 %v51
    %v236 = vpop.f32.mrb[0].mxu0
    %v237 = vadd.f32 %v158, %v236
    %v238 = vpop.f32.mrb[0].mxu0
    %239 = vdwg.mxu0
    %240 = vmatprep.subr.mxu0 0.0
    %241 = vmatpush1.msra.mxu0 %v89
    %242 = vmatprep.subr.mxu0 0.0
    %243 = vmatpush1.msra.mxu0 %v90
    %244 = vmatprep.subr.mxu0 0.0
    %245 = vmatpush1.msra.mxu0 %v91
    %246 = vmatprep.subr.mxu0 0.0
    %247 = vmatpush1.msra.mxu0 %v92
    %248 = vmatprep.subr.mxu0 0.0
    %249 = vmatpush1.msra.mxu0 %v93
    %250 = vmatprep.subr.mxu0 0.0
    %251 = vmatpush1.msra.mxu0 %v94
    %252 = vmatprep.subr.mxu0 0.0
    %253 = vmatpush1.msra.mxu0 %v95
    %254 = vmatprep.subr.mxu0 0.0
    %255 = vmatpush1.msra.mxu0 %v96
    %256 = vmatprep.subr.mxu0 0.0
    %257 = vmatpush1.msra.mxu0 %v97
    %258 = vmatprep.subr.mxu0 0.0
    %259 = vmatpush1.msra.mxu0 %v98
    %260 = vmatprep.subr.mxu0 0.0
    %261 = vmatpush1.msra.mxu0 %v99
    %262 = vmatprep.subr.mxu0 0.0
    %263 = vmatpush1.msra.mxu0 %v100
    %264 = vmatprep.subr.mxu0 0.0
    %265 = vmatpush1.msra.mxu0 %v101
    %266 = vmatprep.subr.mxu0 0.0
    %267 = vmatpush1.msra.mxu0 %v102
    %268 = vmatprep.subr.mxu0 0.0
    %269 = vmatpush1.msra.mxu0 %v103
    %270 = vmatprep.subr.mxu0 0.0
    %271 = vmatpush1.msra.mxu0 %v104
    %272 = vmatprep.subr.mxu0 0.0
    %273 = vmatpush1.msra.mxu0 %v105
    %274 = vmatprep.subr.mxu0 0.0
    %275 = vmatpush1.msra.mxu0 %v106
    %276 = vmatprep.subr.mxu0 0.0
    %277 = vmatpush1.msra.mxu0 %v107
    %278 = vmatprep.subr.mxu0 0.0
    %279 = vmatpush1.msra.mxu0 %v108
    %280 = vmatprep.subr.mxu0 0.0
    %281 = vmatpush1.msra.mxu0 %v109
    %282 = vmatprep.subr.mxu0 0.0
    %283 = vmatpush1.msra.mxu0 %v110
    %284 = vmatprep.subr.mxu0 0.0
    %285 = vmatpush1.msra.mxu0 %v111
    %286 = vmatprep.subr.mxu0 0.0
    %287 = vmatpush1.msra.mxu0 %v112
    %288 = vmatprep.subr.mxu0 0.0
    %289 = vmatpush1.msra.mxu0 %v113
    %290 = vmatprep.subr.mxu0 0.0
    %291 = vmatpush1.msra.mxu0 %v114
    %292 = vmatprep.subr.mxu0 0.0
    %293 = vmatpush1.msra.mxu0 %v115
    %294 = vmatprep.subr.mxu0 0.0
    %295 = vmatpush1.msra.mxu0 %v116
    %296 = vmatprep.subr.mxu0 0.0
    %297 = vmatpush1.msra.mxu0 %v117
    %298 = vmatprep.subr.mxu0 0.0
    %299 = vmatpush1.msra.mxu0 %v118
    %300 = vmatprep.subr.mxu0 0.0
    %301 = vmatpush1.msra.mxu0 %v119
    %302 = vmatprep.subr.mxu0 0.0
    %303 = vmatpush1.msra.mxu0 %v120
    %304 = vmatprep.mubr.f32.mxu0 %v42
    %305 = vmatmul.mubr.f32.gmra.mrb[0].mxu0 %v41
    %v306 = vpop.f32.mrb[0].mxu0
    %v307 = vadd.f32 %v227, %v306
    %v308 = vpop.f32.mrb[0].mxu0
    %309 = vmatprep.mubr.f32.mxu0 %v48
    %310 = vmatmul.mubr.f32.gmra.mrb[0].mxu0 %v47
    %v311 = vpop.f32.mrb[0].mxu0
    %v312 = vadd.f32 %v232, %v311
    %v313 = vpop.f32.mrb[0].mxu0
    %314 = vmatprep.mubr.f32.mxu0 %v54
    %315 = vmatmul.mubr.f32.gmra.mrb[0].mxu0 %v53
    %v316 = vpop.f32.mrb[0].mxu0
    %v317 = vadd.f32 %v237, %v316
    %v318 = vpop.f32.mrb[0].mxu0
    %319 = vdwg.mxu0
    %320 = vmatprep.subr.mxu0 0.0
    %321 = vmatpush1.msra.mxu0 %v121
    %322 = vmatprep.subr.mxu0 0.0
    %323 = vmatpush1.msra.mxu0 %v122
    %324 = vmatprep.subr.mxu0 0.0
    %325 = vmatpush1.msra.mxu0 %v123
    %326 = vmatprep.subr.mxu0 0.0
    %327 = vmatpush1.msra.mxu0 %v124
    %328 = vmatprep.subr.mxu0 0.0
    %329 = vmatpush1.msra.mxu0 %v125
    %330 = vmatprep.subr.mxu0 0.0
    %331 = vmatpush1.msra.mxu0 %v126
    %332 = vmatprep.subr.mxu0 0.0
    %333 = vmatpush1.msra.mxu0 %v127
    %334 = vmatprep.subr.mxu0 0.0
    %335 = vmatpush1.msra.mxu0 %v128
    %336 = vmatprep.subr.mxu0 0.0
    %337 = vmatpush1.msra.mxu0 %v129
    %338 = vmatprep.subr.mxu0 0.0
    %339 = vmatpush1.msra.mxu0 %v130
    %340 = vmatprep.subr.mxu0 0.0
    %341 = vmatpush1.msra.mxu0 %v131
    %342 = vmatprep.subr.mxu0 0.0
    %343 = vmatpush1.msra.mxu0 %v132
    %344 = vmatprep.subr.mxu0 0.0
    %345 = vmatpush1.msra.mxu0 %v133
    %346 = vmatprep.subr.mxu0 0.0
    %347 = vmatpush1.msra.mxu0 %v134
    %348 = vmatprep.subr.mxu0 0.0
    %349 = vmatpush1.msra.mxu0 %v135
    %350 = vmatprep.subr.mxu0 0.0
    %351 = vmatpush1.msra.mxu0 %v136
    %352 = vmatprep.subr.mxu0 0.0
    %353 = vmatpush1.msra.mxu0 %v137
    %354 = vmatprep.subr.mxu0 0.0
    %355 = vmatpush1.msra.mxu0 %v138
    %356 = vmatprep.subr.mxu0 0.0
    %357 = vmatpush1.msra.mxu0 %v139
    %358 = vmatprep.subr.mxu0 0.0
    %359 = vmatpush1.msra.mxu0 %v140
    %360 = vmatprep.subr.mxu0 0.0
    %361 = vmatpush1.msra.mxu0 %v141
    %362 = vmatprep.subr.mxu0 0.0
    %363 = vmatpush1.msra.mxu0 %v142
    %364 = vmatprep.subr.mxu0 0.0
    %365 = vmatpush1.msra.mxu0 %v143
    %366 = vmatprep.subr.mxu0 0.0
    %367 = vmatpush1.msra.mxu0 %v144
    %368 = vmatprep.subr.mxu0 0.0
    %369 = vmatpush1.msra.mxu0 %v145
    %370 = vmatprep.subr.mxu0 0.0
    %371 = vmatpush1.msra.mxu0 %v146
    %372 = vmatprep.subr.mxu0 0.0
    %373 = vmatpush1.msra.mxu0 %v147
    %374 = vmatprep.subr.mxu0 0.0
    %375 = vmatpush1.msra.mxu0 %v148
    %376 = vmatprep.subr.mxu0 0.0
    %377 = vmatpush1.msra.mxu0 %v149
    %378 = vmatprep.subr.mxu0 0.0
    %379 = vmatpush1.msra.mxu0 %v150
    %380 = vmatprep.subr.mxu0 0.0
    %381 = vmatpush1.msra.mxu0 %v151
    %382 = vmatprep.subr.mxu0 0.0
    %383 = vmatpush1.msra.mxu0 %v152
    %384 = vmatprep.mubr.f32.mxu0 %v44
    %385 = vmatmul.mubr.f32.gmra.mrb[0].mxu0 %v43
    %v386 = vpop.f32.mrb[0].mxu0
    %v387 = vadd.f32 %v307, %v386
    %v388 = vpop.f32.mrb[0].mxu0
    %389 = vmatprep.mubr.f32.mxu0 %v50
    %390 = vmatmul.mubr.f32.gmra.mrb[0].mxu0 %v49
    %v391 = vpop.f32.mrb[0].mxu0
    %v392 = vadd.f32 %v312, %v391
    %v393 = vpop.f32.mrb[0].mxu0
    %394 = vmatprep.mubr.f32.mxu0 %v56
    %395 = vmatmul.mubr.f32.gmra.mrb[0].mxu0 %v55
    %v396 = vpop.f32.mrb[0].mxu0
    %v397 = vadd.f32 %v317, %v396
    %v398 = vpop.f32.mrb[0].mxu0
    %399 = vdwg.mxu0
    %v400 = vmax.f32 %v387, 0.0
    %v401 = vmax.f32 %v392, 0.0
    %v402 = vmax.f32 %v397, 0.0
    %v403 = vld [vmem:[%s3] sm:$0xff]
    %v404 = vld [vmem:[%s3 + $0x8] sm:$0xff]
    %v405 = vld [vmem:[%s3 + $0x10] sm:$0xff]
    %v406 = vld [vmem:[%s3 + $0x18] sm:$0xff]
    %v407 = vld [vmem:[%s3 + $0x20] sm:$0xff]
    %v408 = vld [vmem:[%s3 + $0x28] sm:$0xff]
    %v409 = vld [vmem:[%s3 + $0x30] sm:$0xff]
    %v410 = vld [vmem:[%s3 + $0x38] sm:$0xff]
    %v411 = vld [vmem:[%s3 + $0x40] sm:$0xff]
    %v412 = vld [vmem:[%s3 + $0x48] sm:$0xff]
    %v413 = vld [vmem:[%s3 + $0x50] sm:$0xff]
    %v414 = vld [vmem:[%s3 + $0x58] sm:$0xff]
    %v415 = vld [vmem:[%s3 + $0x60] sm:$0xff]
    %v416 = vld [vmem:[%s3 + $0x68] sm:$0xff]
    %v417 = vld [vmem:[%s3 + $0x70] sm:$0xff]
    %v418 = vld [vmem:[%s3 + $0x78] sm:$0xff]
    %vm419 = vcmask 162816
    %v421 = vsel %vm419, %v403, 0
    %v424 = vsel %vm419, %v404, 0
    %v427 = vsel %vm419, %v405, 0
    %v430 = vsel %vm419, %v406, 0
    %v433 = vsel %vm419, %v407, 0
    %v436 = vsel %vm419, %v408, 0
    %v439 = vsel %vm419, %v409, 0
    %v442 = vsel %vm419, %v410, 0
    %v445 = vsel %vm419, %v411, 0
    %v448 = vsel %vm419, %v412, 0
    %v451 = vsel %vm419, %v413, 0
    %v454 = vsel %vm419, %v414, 0
    %v457 = vsel %vm419, %v415, 0
    %v460 = vsel %vm419, %v416, 0
    %v463 = vsel %vm419, %v417, 0
    %v466 = vsel %vm419, %v418, 0
    %vm468 = vcmask 1043456
    %v470 = vsel %vm468, %v402, 0
    %472 = vmatprep.subr.mxu0 0.0
    %473 = vmatpush1.msra.mxu0 %v400
    %474 = vmatprep.subr.mxu0 0.0
    %475 = vmatpush1.msra.mxu0 %v401
    %476 = vmatprep.subr.mxu0 0.0
    %477 = vmatpush1.msra.mxu0 %v470
    %478 = vmatprep.subr.mxu0 0.0
    %479 = vmatpush1.msra.mxu0 0.0
    %480 = vmatprep.subr.mxu0 0.0
    %481 = vmatpush1.msra.mxu0 0.0
    %482 = vmatprep.subr.mxu0 0.0
    %483 = vmatpush1.msra.mxu0 0.0
    %484 = vmatprep.subr.mxu0 0.0
    %485 = vmatpush1.msra.mxu0 0.0
    %486 = vmatprep.subr.mxu0 0.0
    %487 = vmatpush1.msra.mxu0 0.0
    %488 = vmatprep.subr.mxu0 0.0
    %489 = vmatpush1.msra.mxu0 0.0
    %490 = vmatprep.subr.mxu0 0.0
    %491 = vmatpush1.msra.mxu0 0.0
    %492 = vmatprep.subr.mxu0 0.0
    %493 = vmatpush1.msra.mxu0 0.0
    %494 = vmatprep.subr.mxu0 0.0
    %495 = vmatpush1.msra.mxu0 0.0
    %496 = vmatprep.subr.mxu0 0.0
    %497 = vmatpush1.msra.mxu0 0.0
    %498 = vmatprep.subr.mxu0 0.0
    %499 = vmatpush1.msra.mxu0 0.0
    %500 = vmatprep.subr.mxu0 0.0
    %501 = vmatpush1.msra.mxu0 0.0
    %502 = vmatprep.subr.mxu0 0.0
    %503 = vmatpush1.msra.mxu0 0.0
    %504 = vmatprep.subr.mxu0 0.0
    %505 = vmatpush1.msra.mxu0 0.0
    %506 = vmatprep.subr.mxu0 0.0
    %507 = vmatpush1.msra.mxu0 0.0
    %508 = vmatprep.subr.mxu0 0.0
    %509 = vmatpush1.msra.mxu0 0.0
    %510 = vmatprep.subr.mxu0 0.0
    %511 = vmatpush1.msra.mxu0 0.0
    %512 = vmatprep.subr.mxu0 0.0
    %513 = vmatpush1.msra.mxu0 0.0
    %514 = vmatprep.subr.mxu0 0.0
    %515 = vmatpush1.msra.mxu0 0.0
    %516 = vmatprep.subr.mxu0 0.0
    %517 = vmatpush1.msra.mxu0 0.0
    %518 = vmatprep.subr.mxu0 0.0
    %519 = vmatpush1.msra.mxu0 0.0
    %520 = vmatprep.subr.mxu0 0.0
    %521 = vmatpush1.msra.mxu0 0.0
    %522 = vmatprep.subr.mxu0 0.0
    %523 = vmatpush1.msra.mxu0 0.0
    %524 = vmatprep.subr.mxu0 0.0
    %525 = vmatpush1.msra.mxu0 0.0
    %526 = vmatprep.subr.mxu0 0.0
    %527 = vmatpush1.msra.mxu0 0.0
    %528 = vmatprep.subr.mxu0 0.0
    %529 = vmatpush1.msra.mxu0 0.0
    %530 = vmatprep.subr.mxu0 0.0
    %531 = vmatpush1.msra.mxu0 0.0
    %532 = vmatprep.subr.mxu0 0.0
    %533 = vmatpush1.msra.mxu0 0.0
    %534 = vmatprep.subr.mxu0 0.0
    %535 = vmatpush1.msra.mxu0 0.0
    %536 = vmatprep.mubr.f32.mxu0 0.0
    %537 = vmatmul.mubr.f32.gmra.mrb[0].mxu0 %v421
    %v538 = vpop.f32.mrb[0].mxu0
    %v539 = vadd.f32 0.0, %v538
    %v540 = vpop.f32.mrb[0].mxu0
    %541 = vmatprep.mubr.f32.mxu0 0.0
    %542 = vmatmul.mubr.f32.gmra.mrb[0].mxu0 %v424
    %v543 = vpop.f32.mrb[0].mxu0
    %v544 = vpop.f32.mrb[0].mxu0
    %545 = vmatprep.mubr.f32.mxu0 0.0
    %546 = vmatmul.mubr.f32.gmra.mrb[0].mxu0 %v427
    %v547 = vpop.f32.mrb[0].mxu0
    %v548 = vpop.f32.mrb[0].mxu0
    %549 = vmatprep.mubr.f32.mxu0 0.0
    %550 = vmatmul.mubr.f32.gmra.mrb[0].mxu0 %v430
    %v551 = vpop.f32.mrb[0].mxu0
    %v552 = vpop.f32.mrb[0].mxu0
    %553 = vmatprep.mubr.f32.mxu0 0.0
    %554 = vmatmul.mubr.f32.gmra.mrb[0].mxu0 %v433
    %v555 = vpop.f32.mrb[0].mxu0
    %v556 = vpop.f32.mrb[0].mxu0
    %557 = vmatprep.mubr.f32.mxu0 0.0
    %558 = vmatmul.mubr.f32.gmra.mrb[0].mxu0 %v436
    %v559 = vpop.f32.mrb[0].mxu0
    %v560 = vpop.f32.mrb[0].mxu0
    %561 = vmatprep.mubr.f32.mxu0 0.0
    %562 = vmatmul.mubr.f32.gmra.mrb[0].mxu0 %v439
    %v563 = vpop.f32.mrb[0].mxu0
    %v564 = vpop.f32.mrb[0].mxu0
    %565 = vmatprep.mubr.f32.mxu0 0.0
    %566 = vmatmul.mubr.f32.gmra.mrb[0].mxu0 %v442
    %v567 = vpop.f32.mrb[0].mxu0
    %v568 = vpop.f32.mrb[0].mxu0
    %569 = vmatprep.mubr.f32.mxu0 0.0
    %570 = vmatmul.mubr.f32.gmra.mrb[0].mxu0 %v445
    %v571 = vpop.f32.mrb[0].mxu0
    %v572 = vpop.f32.mrb[0].mxu0
    %573 = vmatprep.mubr.f32.mxu0 0.0
    %574 = vmatmul.mubr.f32.gmra.mrb[0].mxu0 %v448
    %v575 = vpop.f32.mrb[0].mxu0
    %v576 = vpop.f32.mrb[0].mxu0
    %577 = vmatprep.mubr.f32.mxu0 0.0
    %578 = vmatmul.mubr.f32.gmra.mrb[0].mxu0 %v451
    %v579 = vpop.f32.mrb[0].mxu0
    %v580 = vpop.f32.mrb[0].mxu0
    %581 = vmatprep.mubr.f32.mxu0 0.0
    %582 = vmatmul.mubr.f32.gmra.mrb[0].mxu0 %v454
    %v583 = vpop.f32.mrb[0].mxu0
    %v584 = vpop.f32.mrb[0].mxu0
    %585 = vmatprep.mubr.f32.mxu0 0.0
    %586 = vmatmul.mubr.f32.gmra.mrb[0].mxu0 %v457
    %v587 = vpop.f32.mrb[0].mxu0
    %v588 = vpop.f32.mrb[0].mxu0
    %589 = vmatprep.mubr.f32.mxu0 0.0
    %590 = vmatmul.mubr.f32.gmra.mrb[0].mxu0 %v460
    %v591 = vpop.f32.mrb[0].mxu0
    %v592 = vpop.f32.mrb[0].mxu0
    %593 = vmatprep.mubr.f32.mxu0 0.0
    %594 = vmatmul.mubr.f32.gmra.mrb[0].mxu0 %v463
    %v595 = vpop.f32.mrb[0].mxu0
    %v596 = vpop.f32.mrb[0].mxu0
    %597 = vmatprep.mubr.f32.mxu0 0.0
    %598 = vmatmul.mubr.f32.gmra.mrb[0].mxu0 %v466
    %v599 = vpop.f32.mrb[0].mxu0
    %v600 = vpop.f32.mrb[0].mxu0
    %601 = vdwg.mxu0
    %v602 = vld [vmem:[%s4] sm:$0xff]
    %v603 = vld [vmem:[%s4 + $0x8] sm:$0xff]
    %v605 = vsel %vm419, %v602, 0
    %v608 = vsel %vm419, %v603, 0
    %610 = vmatprep.subr.mxu0 0.0
    %611 = vmatpush1.msra.mxu0 %v400
    %612 = vmatprep.subr.mxu0 0.0
    %613 = vmatpush1.msra.mxu0 %v401
    %614 = vmatprep.subr.mxu0 0.0
    %615 = vmatpush1.msra.mxu0 %v470
    %616 = vmatprep.subr.mxu0 0.0
    %617 = vmatpush1.msra.mxu0 0.0
    %618 = vmatprep.subr.mxu0 0.0
    %619 = vmatpush1.msra.mxu0 0.0
    %620 = vmatprep.subr.mxu0 0.0
    %621 = vmatpush1.msra.mxu0 0.0
    %622 = vmatprep.subr.mxu0 0.0
    %623 = vmatpush1.msra.mxu0 0.0
    %624 = vmatprep.subr.mxu0 0.0
    %625 = vmatpush1.msra.mxu0 0.0
    %626 = vmatprep.subr.mxu0 0.0
    %627 = vmatpush1.msra.mxu0 0.0
    %628 = vmatprep.subr.mxu0 0.0
    %629 = vmatpush1.msra.mxu0 0.0
    %630 = vmatprep.subr.mxu0 0.0
    %631 = vmatpush1.msra.mxu0 0.0
    %632 = vmatprep.subr.mxu0 0.0
    %633 = vmatpush1.msra.mxu0 0.0
    %634 = vmatprep.subr.mxu0 0.0
    %635 = vmatpush1.msra.mxu0 0.0
    %636 = vmatprep.subr.mxu0 0.0
    %637 = vmatpush1.msra.mxu0 0.0
    %638 = vmatprep.subr.mxu0 0.0
    %639 = vmatpush1.msra.mxu0 0.0
    %640 = vmatprep.subr.mxu0 0.0
    %641 = vmatpush1.msra.mxu0 0.0
    %642 = vmatprep.subr.mxu0 0.0
    %643 = vmatpush1.msra.mxu0 0.0
    %644 = vmatprep.subr.mxu0 0.0
    %645 = vmatpush1.msra.mxu0 0.0
    %646 = vmatprep.subr.mxu0 0.0
    %647 = vmatpush1.msra.mxu0 0.0
    %648 = vmatprep.subr.mxu0 0.0
    %649 = vmatpush1.msra.mxu0 0.0
    %650 = vmatprep.subr.mxu0 0.0
    %651 = vmatpush1.msra.mxu0 0.0
    %652 = vmatprep.subr.mxu0 0.0
    %653 = vmatpush1.msra.mxu0 0.0
    %654 = vmatprep.subr.mxu0 0.0
    %655 = vmatpush1.msra.mxu0 0.0
    %656 = vmatprep.subr.mxu0 0.0
    %657 = vmatpush1.msra.mxu0 0.0
    %658 = vmatprep.subr.mxu0 0.0
    %659 = vmatpush1.msra.mxu0 0.0
    %660 = vmatprep.subr.mxu0 0.0
    %661 = vmatpush1.msra.mxu0 0.0
    %662 = vmatprep.subr.mxu0 0.0
    %663 = vmatpush1.msra.mxu0 0.0
    %664 = vmatprep.subr.mxu0 0.0
    %665 = vmatpush1.msra.mxu0 0.0
    %666 = vmatprep.subr.mxu0 0.0
    %667 = vmatpush1.msra.mxu0 0.0
    %668 = vmatprep.subr.mxu0 0.0
    %669 = vmatpush1.msra.mxu0 0.0
    %670 = vmatprep.subr.mxu0 0.0
    %671 = vmatpush1.msra.mxu0 0.0
    %672 = vmatprep.subr.mxu0 0.0
    %673 = vmatpush1.msra.mxu0 0.0
    %674 = vmatprep.mubr.f32.mxu0 0.0
    %675 = vmatmul.mubr.f32.gmra.mrb[0].mxu0 %v605
    %v676 = vpop.f32.mrb[0].mxu0
    %v677 = vadd.f32 0.0, %v676
    %v678 = vpop.f32.mrb[0].mxu0
    %679 = vmatprep.mubr.f32.mxu0 0.0
    %680 = vmatmul.mubr.f32.gmra.mrb[0].mxu0 %v608
    %v681 = vpop.f32.mrb[0].mxu0
    %v682 = vadd.f32 0.0, %v681
    %v683 = vpop.f32.mrb[0].mxu0
    %684 = vdwg.mxu0
    %v685 = vmul.f32 %v677, %v677
    %v686 = vmul.f32 %v682, %v682
    %687 = vadd.xlane.f32.xlu0 %v685
    %v688 = vpop.xlane.xlu0 %687
    %689 = vadd.xlane.f32.xlu0 %v686
    %v690 = vpop.xlane.xlu0 %689
    %v691 = vadd.f32 %v688, 1e-08
    %v692 = vadd.f32 %v690, 1e-08
    %v693 = vrsqrt.pop %v691
    %v694 = vrsqrt.pop %v692
    %v695 = vmul.f32 %v677, %v693
    %v696 = vmul.f32 %v682, %v694
    %697 = vmatprep.subr.mxu0 0.0
    %698 = vmatpush1.xpose.msra.mxu0 %v695
    %699 = vmatprep.subr.mxu0 0.0
    %700 = vmatpush1.xpose.msra.mxu0 %v696
    %701 = vmatprep.subr.mxu0 0.0
    %702 = vmatpush1.xpose.msra.mxu0 0.0
    %703 = vmatprep.subr.mxu0 0.0
    %704 = vmatpush1.xpose.msra.mxu0 0.0
    %705 = vmatprep.subr.mxu0 0.0
    %706 = vmatpush1.xpose.msra.mxu0 0.0
    %707 = vmatprep.subr.mxu0 0.0
    %708 = vmatpush1.xpose.msra.mxu0 0.0
    %709 = vmatprep.subr.mxu0 0.0
    %710 = vmatpush1.xpose.msra.mxu0 0.0
    %711 = vmatprep.subr.mxu0 0.0
    %712 = vmatpush1.xpose.msra.mxu0 0.0
    %713 = vmatprep.subr.mxu0 0.0
    %714 = vmatpush1.xpose.msra.mxu0 0.0
    %715 = vmatprep.subr.mxu0 0.0
    %716 = vmatpush1.xpose.msra.mxu0 0.0
    %717 = vmatprep.subr.mxu0 0.0
    %718 = vmatpush1.xpose.msra.mxu0 0.0
    %719 = vmatprep.subr.mxu0 0.0
    %720 = vmatpush1.xpose.msra.mxu0 0.0
    %721 = vmatprep.subr.mxu0 0.0
    %722 = vmatpush1.xpose.msra.mxu0 0.0
    %723 = vmatprep.subr.mxu0 0.0
    %724 = vmatpush1.xpose.msra.mxu0 0.0
    %725 = vmatprep.subr.mxu0 0.0
    %726 = vmatpush1.xpose.msra.mxu0 0.0
    %727 = vmatprep.subr.mxu0 0.0
    %728 = vmatpush1.xpose.msra.mxu0 0.0
    %729 = vmatprep.subr.mxu0 0.0
    %730 = vmatpush1.xpose.msra.mxu0 0.0
    %731 = vmatprep.subr.mxu0 0.0
    %732 = vmatpush1.xpose.msra.mxu0 0.0
    %733 = vmatprep.subr.mxu0 0.0
    %734 = vmatpush1.xpose.msra.mxu0 0.0
    %735 = vmatprep.subr.mxu0 0.0
    %736 = vmatpush1.xpose.msra.mxu0 0.0
    %737 = vmatprep.subr.mxu0 0.0
    %738 = vmatpush1.xpose.msra.mxu0 0.0
    %739 = vmatprep.subr.mxu0 0.0
    %740 = vmatpush1.xpose.msra.mxu0 0.0
    %741 = vmatprep.subr.mxu0 0.0
    %742 = vmatpush1.xpose.msra.mxu0 0.0
    %743 = vmatprep.subr.mxu0 0.0
    %744 = vmatpush1.xpose.msra.mxu0 0.0
    %745 = vmatprep.subr.mxu0 0.0
    %746 = vmatpush1.xpose.msra.mxu0 0.0
    %747 = vmatprep.subr.mxu0 0.0
    %748 = vmatpush1.xpose.msra.mxu0 0.0
    %749 = vmatprep.subr.mxu0 0.0
    %750 = vmatpush1.xpose.msra.mxu0 0.0
    %751 = vmatprep.subr.mxu0 0.0
    %752 = vmatpush1.xpose.msra.mxu0 0.0
    %753 = vmatprep.subr.mxu0 0.0
    %754 = vmatpush1.xpose.msra.mxu0 0.0
    %755 = vmatprep.subr.mxu0 0.0
    %756 = vmatpush1.xpose.msra.mxu0 0.0
    %757 = vmatprep.subr.mxu0 0.0
    %758 = vmatpush1.xpose.msra.mxu0 0.0
    %759 = vmatprep.subr.mxu0 0.0
    %760 = vmatpush1.xpose.msra.mxu0 0.0
    %761 = vmatprep.mubr.f32.mxu0 0.0
    %762 = vmatmul.mubr.f32.gmra.mrb[0].mxu0 %v695
    %v763 = vpop.f32.mrb[0].mxu0
    %v764 = vadd.f32 0.0, %v763
    %v765 = vpop.f32.mrb[0].mxu0
    %766 = vmatprep.mubr.f32.mxu0 0.0
    %767 = vmatmul.mubr.f32.gmra.mrb[0].mxu0 %v696
    %v768 = vpop.f32.mrb[0].mxu0
    %v769 = vadd.f32 0.0, %v768
    %v770 = vpop.f32.mrb[0].mxu0
    %771 = vdwg.mxu0
    %v772 = vlaneseq
    %v773 = vand.u32 %v772, 127
    %vm774 = vcmp.lt.s32.totalorder %v773, 10
    %v775 = vsel %vm774, 1, 0
    %vm776 = vcmp.eq.s32.totalorder %v775, 1
    %v777 = vsel %vm776, %v764, -1e+30
    %v778 = vsel %vm776, %v769, -1e+30
    %vm779 = vcmask 130048
    %v780 = vsel %vm779, %v777, -inf
    %781 = vmax.xlane.f32.xlu0 %v780
    %v782 = vpop.xlane.xlu0 %781
    %v783 = vsel %vm779, %v778, -inf
    %784 = vmax.xlane.f32.xlu0 %v783
    %v785 = vpop.xlane.xlu0 %784
    %vm786 = vcmp.ge.f32.partialorder %v777, %v782
    %vm787 = vcmp.ge.f32.partialorder %v778, %v785
    %v788 = vsel %vm786, -1e+30, %v777
    %v789 = vsel %vm787, -1e+30, %v778
    %v790 = vsel %vm779, %v788, -inf
    %791 = vmax.xlane.f32.xlu0 %v790
    %v792 = vpop.xlane.xlu0 %791
    %v793 = vsel %vm779, %v789, -inf
    %794 = vmax.xlane.f32.xlu0 %v793
    %v795 = vpop.xlane.xlu0 %794
    %vm796 = vcmp.ge.f32.partialorder %v788, %v792
    %vm797 = vcmp.ge.f32.partialorder %v789, %v795
    %v798 = vsel %vm796, -1e+30, %v788
    %v799 = vsel %vm797, -1e+30, %v789
    %v800 = vsel %vm779, %v798, -inf
    %801 = vmax.xlane.f32.xlu0 %v800
    %v802 = vpop.xlane.xlu0 %801
    %v803 = vsel %vm779, %v799, -inf
    %804 = vmax.xlane.f32.xlu0 %v803
    %v805 = vpop.xlane.xlu0 %804
    %vm806 = vcmp.ge.f32.partialorder %v798, %v802
    %vm807 = vcmp.ge.f32.partialorder %v799, %v805
    %v808 = vsel %vm806, -1e+30, %v798
    %v809 = vsel %vm807, -1e+30, %v799
    %v810 = vsel %vm779, %v808, -inf
    %811 = vmax.xlane.f32.xlu0 %v810
    %v812 = vpop.xlane.xlu0 %811
    %v813 = vsel %vm779, %v809, -inf
    %814 = vmax.xlane.f32.xlu0 %v813
    %v815 = vpop.xlane.xlu0 %814
    %vm816 = vcmp.ge.f32.partialorder %v808, %v812
    %vm817 = vcmp.ge.f32.partialorder %v809, %v815
    %v818 = vsel %vm816, -1e+30, %v808
    %v819 = vsel %vm817, -1e+30, %v809
    %v820 = vsel %vm779, %v818, -inf
    %821 = vmax.xlane.f32.xlu0 %v820
    %v822 = vpop.xlane.xlu0 %821
    %v823 = vsel %vm779, %v819, -inf
    %824 = vmax.xlane.f32.xlu0 %v823
    %v825 = vpop.xlane.xlu0 %824
    %vm826 = vcmp.ge.f32.partialorder %v818, %v822
    %vm827 = vcmp.ge.f32.partialorder %v819, %v825
    %v828 = vsel %vm826, -1e+30, %v818
    %v829 = vsel %vm827, -1e+30, %v819
    %v830 = vsel %vm779, %v828, -inf
    %831 = vmax.xlane.f32.xlu0 %v830
    %v832 = vpop.xlane.xlu0 %831
    %v833 = vsel %vm779, %v829, -inf
    %834 = vmax.xlane.f32.xlu0 %v833
    %v835 = vpop.xlane.xlu0 %834
    %vm836 = vcmp.ge.f32.partialorder %v828, %v832
    %vm837 = vcmp.ge.f32.partialorder %v829, %v835
    %v838 = vsel %vm836, -1e+30, %v828
    %v839 = vsel %vm837, -1e+30, %v829
    %v840 = vsel %vm779, %v838, -inf
    %841 = vmax.xlane.f32.xlu0 %v840
    %v842 = vpop.xlane.xlu0 %841
    %v843 = vsel %vm779, %v839, -inf
    %844 = vmax.xlane.f32.xlu0 %v843
    %v845 = vpop.xlane.xlu0 %844
    %vm846 = vcmp.ge.f32.partialorder %v838, %v842
    %vm847 = vcmp.ge.f32.partialorder %v839, %v845
    %v848 = vsel %vm846, -1e+30, %v838
    %v849 = vsel %vm847, -1e+30, %v839
    %v850 = vsel %vm779, %v848, -inf
    %851 = vmax.xlane.f32.xlu0 %v850
    %v852 = vpop.xlane.xlu0 %851
    %v853 = vsel %vm779, %v849, -inf
    %854 = vmax.xlane.f32.xlu0 %v853
    %v855 = vpop.xlane.xlu0 %854
    %vm856 = vcmp.ge.f32.partialorder %v848, %v852
    %vm857 = vcmp.ge.f32.partialorder %v849, %v855
    %v858 = vsel %vm856, -1e+30, %v848
    %v859 = vsel %vm857, -1e+30, %v849
    %v860 = vsel %vm779, %v858, -inf
    %861 = vmax.xlane.f32.xlu0 %v860
    %v862 = vpop.xlane.xlu0 %861
    %v863 = vsel %vm779, %v859, -inf
    %864 = vmax.xlane.f32.xlu0 %v863
    %v865 = vpop.xlane.xlu0 %864
    %866 = vxpose.xlu0.b32.start [1/16] %v862, 128
    %867 = vxpose.xlu0.b32.cont [2/16] %v865, 128
    %868 = vxpose.xlu0.b32.cont [3/16] 0.0, 128
    %869 = vxpose.xlu0.b32.cont [4/16] 0.0, 128
    %870 = vxpose.xlu0.b32.cont [5/16] 0.0, 128
    %871 = vxpose.xlu0.b32.cont [6/16] 0.0, 128
    %872 = vxpose.xlu0.b32.cont [7/16] 0.0, 128
    %873 = vxpose.xlu0.b32.cont [8/16] 0.0, 128
    %874 = vxpose.xlu0.b32.cont [9/16] 0.0, 128
    %875 = vxpose.xlu0.b32.cont [10/16] 0.0, 128
    %876 = vxpose.xlu0.b32.cont [11/16] 0.0, 128
    %877 = vxpose.xlu0.b32.cont [12/16] 0.0, 128
    %878 = vxpose.xlu0.b32.cont [13/16] 0.0, 128
    %879 = vxpose.xlu0.b32.cont [14/16] 0.0, 128
    %880 = vxpose.xlu0.b32.cont [15/16] 0.0, 128
    %881 = vxpose.xlu0.b32.end [16/16] 0.0, 128
    %v882 = vpop.trf.xlu0
    %v883 = vpop.trf.xlu0
    %v884 = vpop.trf.xlu0
    %v885 = vpop.trf.xlu0
    %v886 = vpop.trf.xlu0
    %v887 = vpop.trf.xlu0
    %v888 = vpop.trf.xlu0
    %v889 = vpop.trf.xlu0
    %v890 = vpop.trf.xlu0
    %v891 = vpop.trf.xlu0
    %v892 = vpop.trf.xlu0
    %v893 = vpop.trf.xlu0
    %v894 = vpop.trf.xlu0
    %v895 = vpop.trf.xlu0
    %v896 = vpop.trf.xlu0
    %v897 = vpop.trf.xlu0
    %v898 = vlaneseq
    %v899 = vshrl.u32 %v898, 7
    %v900 = vsub.s32 0, %v899
    %v901 = vrot.slane %v882, %v900
    %v902 = vmax.f32 %v862, %v901
    %v903 = vmax.f32 %v865, %v901
    %vm904 = vcmp.ge.f32.partialorder %v777, %v902
    %vm905 = vcmp.ge.f32.partialorder %v778, %v903
    %v906 = vsel %vm904, %v777, -1e+30
    %v907 = vsel %vm905, %v778, -1e+30
    %v908 = vsel %vm779, %v906, -inf
    %909 = vmax.xlane.f32.xlu0 %v908
    %v910 = vpop.xlane.xlu0 %909
    %v911 = vsel %vm779, %v907, -inf
    %912 = vmax.xlane.f32.xlu0 %v911
    %v913 = vpop.xlane.xlu0 %912
    %v914 = vsub.f32 %v906, %v910
    %v915 = vsub.f32 %v907, %v913
    %v916 = vmul.f32 %v914, 1.442695
    %v917 = vpow.pop %v916
    %v918 = vmul.f32 %v915, 1.442695
    %v919 = vpow.pop %v918
    %v920 = vsel %vm904, %v917, 0.0
    %v921 = vsel %vm905, %v919, 0.0
    %v923 = vsel %vm779, %v920, 0
    %v926 = vsel %vm779, %v921, 0
    %928 = vmatprep.subr.mxu0 0.0
    %929 = vmatpush1.msra.mxu0 %v677
    %930 = vmatprep.subr.mxu0 0.0
    %931 = vmatpush1.msra.mxu0 %v682
    %932 = vmatprep.subr.mxu0 0.0
    %933 = vmatpush1.msra.mxu0 0.0
    %934 = vmatprep.subr.mxu0 0.0
    %935 = vmatpush1.msra.mxu0 0.0
    %936 = vmatprep.subr.mxu0 0.0
    %937 = vmatpush1.msra.mxu0 0.0
    %938 = vmatprep.subr.mxu0 0.0
    %939 = vmatpush1.msra.mxu0 0.0
    %940 = vmatprep.subr.mxu0 0.0
    %941 = vmatpush1.msra.mxu0 0.0
    %942 = vmatprep.subr.mxu0 0.0
    %943 = vmatpush1.msra.mxu0 0.0
    %944 = vmatprep.subr.mxu0 0.0
    %945 = vmatpush1.msra.mxu0 0.0
    %946 = vmatprep.subr.mxu0 0.0
    %947 = vmatpush1.msra.mxu0 0.0
    %948 = vmatprep.subr.mxu0 0.0
    %949 = vmatpush1.msra.mxu0 0.0
    %950 = vmatprep.subr.mxu0 0.0
    %951 = vmatpush1.msra.mxu0 0.0
    %952 = vmatprep.subr.mxu0 0.0
    %953 = vmatpush1.msra.mxu0 0.0
    %954 = vmatprep.subr.mxu0 0.0
    %955 = vmatpush1.msra.mxu0 0.0
    %956 = vmatprep.subr.mxu0 0.0
    %957 = vmatpush1.msra.mxu0 0.0
    %958 = vmatprep.subr.mxu0 0.0
    %959 = vmatpush1.msra.mxu0 0.0
    %960 = vmatprep.subr.mxu0 0.0
    %961 = vmatpush1.msra.mxu0 0.0
    %962 = vmatprep.subr.mxu0 0.0
    %963 = vmatpush1.msra.mxu0 0.0
    %964 = vmatprep.subr.mxu0 0.0
    %965 = vmatpush1.msra.mxu0 0.0
    %966 = vmatprep.subr.mxu0 0.0
    %967 = vmatpush1.msra.mxu0 0.0
    %968 = vmatprep.subr.mxu0 0.0
    %969 = vmatpush1.msra.mxu0 0.0
    %970 = vmatprep.subr.mxu0 0.0
    %971 = vmatpush1.msra.mxu0 0.0
    %972 = vmatprep.subr.mxu0 0.0
    %973 = vmatpush1.msra.mxu0 0.0
    %974 = vmatprep.subr.mxu0 0.0
    %975 = vmatpush1.msra.mxu0 0.0
    %976 = vmatprep.subr.mxu0 0.0
    %977 = vmatpush1.msra.mxu0 0.0
    %978 = vmatprep.subr.mxu0 0.0
    %979 = vmatpush1.msra.mxu0 0.0
    %980 = vmatprep.subr.mxu0 0.0
    %981 = vmatpush1.msra.mxu0 0.0
    %982 = vmatprep.subr.mxu0 0.0
    %983 = vmatpush1.msra.mxu0 0.0
    %984 = vmatprep.subr.mxu0 0.0
    %985 = vmatpush1.msra.mxu0 0.0
    %986 = vmatprep.subr.mxu0 0.0
    %987 = vmatpush1.msra.mxu0 0.0
    %988 = vmatprep.subr.mxu0 0.0
    %989 = vmatpush1.msra.mxu0 0.0
    %990 = vmatprep.subr.mxu0 0.0
    %991 = vmatpush1.msra.mxu0 0.0
    %992 = vmatprep.mubr.f32.mxu0 0.0
    %993 = vmatmul.mubr.f32.gmra.mrb[0].mxu0 %v923
    %v994 = vpop.f32.mrb[0].mxu0
    %v995 = vadd.f32 0.0, %v994
    %v996 = vpop.f32.mrb[0].mxu0
    %997 = vmatprep.mubr.f32.mxu0 0.0
    %998 = vmatmul.mubr.f32.gmra.mrb[0].mxu0 %v926
    %v999 = vpop.f32.mrb[0].mxu0
    %v1000 = vadd.f32 0.0, %v999
    %v1001 = vpop.f32.mrb[0].mxu0
    %1002 = vdwg.mxu0
    %s1003 = sld [smem:[#allocation2]]
    %v1004 = vmul.f32 %v995, %v995
    %v1005 = vmul.f32 %v1000, %v1000
    %1006 = vadd.xlane.f32.xlu0 %v1004
    %v1007 = vpop.xlane.xlu0 %1006
    %1008 = vadd.xlane.f32.xlu0 %v1005
    %v1009 = vpop.xlane.xlu0 %1008
    %v1010 = vadd.f32 %v1007, 1e-08
    %v1011 = vadd.f32 %v1009, 1e-08
    %v1012 = vrsqrt.pop %v1010
    %v1013 = vrsqrt.pop %v1011
    %v1014 = vstv %s1003
    %v1015 = vmul.f32 %v1014, %v1012
    %v1016 = vmul.f32 %v1014, %v1013
    %v1017 = vmul.f32 %v995, %v1015
    %v1018 = vmul.f32 %v1000, %v1016
    %v1019 = vmul.f32 %v539, %v539
    %1020 = vadd.xlane.f32.xlu0 %v1019
    %v1021 = vpop.xlane.xlu0 %1020
    %v1022 = vadd.f32 %v1021, 1e-08
    %v1023 = vrsqrt.pop %v1022
    %v1024 = vmul.f32 %v539, %v1023
    %1025 = vmatprep.subr.mxu0 0.0
    %1026 = vmatpush1.xpose.msra.mxu0 %v1024
    %1027 = vmatprep.subr.mxu0 0.0
    %1028 = vmatpush1.xpose.msra.mxu0 0.0
    %1029 = vmatprep.subr.mxu0 0.0
    %1030 = vmatpush1.xpose.msra.mxu0 0.0
    %1031 = vmatprep.subr.mxu0 0.0
    %1032 = vmatpush1.xpose.msra.mxu0 0.0
    %1033 = vmatprep.subr.mxu0 0.0
    %1034 = vmatpush1.xpose.msra.mxu0 0.0
    %1035 = vmatprep.subr.mxu0 0.0
    %1036 = vmatpush1.xpose.msra.mxu0 0.0
    %1037 = vmatprep.subr.mxu0 0.0
    %1038 = vmatpush1.xpose.msra.mxu0 0.0
    %1039 = vmatprep.subr.mxu0 0.0
    %1040 = vmatpush1.xpose.msra.mxu0 0.0
    %1041 = vmatprep.subr.mxu0 0.0
    %1042 = vmatpush1.xpose.msra.mxu0 0.0
    %1043 = vmatprep.subr.mxu0 0.0
    %1044 = vmatpush1.xpose.msra.mxu0 0.0
    %1045 = vmatprep.subr.mxu0 0.0
    %1046 = vmatpush1.xpose.msra.mxu0 0.0
    %1047 = vmatprep.subr.mxu0 0.0
    %1048 = vmatpush1.xpose.msra.mxu0 0.0
    %1049 = vmatprep.subr.mxu0 0.0
    %1050 = vmatpush1.xpose.msra.mxu0 0.0
    %1051 = vmatprep.subr.mxu0 0.0
    %1052 = vmatpush1.xpose.msra.mxu0 0.0
    %1053 = vmatprep.subr.mxu0 0.0
    %1054 = vmatpush1.xpose.msra.mxu0 0.0
    %1055 = vmatprep.subr.mxu0 0.0
    %1056 = vmatpush1.xpose.msra.mxu0 0.0
    %1057 = vmatprep.subr.mxu0 0.0
    %1058 = vmatpush1.xpose.msra.mxu0 0.0
    %1059 = vmatprep.subr.mxu0 0.0
    %1060 = vmatpush1.xpose.msra.mxu0 0.0
    %1061 = vmatprep.subr.mxu0 0.0
    %1062 = vmatpush1.xpose.msra.mxu0 0.0
    %1063 = vmatprep.subr.mxu0 0.0
    %1064 = vmatpush1.xpose.msra.mxu0 0.0
    %1065 = vmatprep.subr.mxu0 0.0
    %1066 = vmatpush1.xpose.msra.mxu0 0.0
    %1067 = vmatprep.subr.mxu0 0.0
    %1068 = vmatpush1.xpose.msra.mxu0 0.0
    %1069 = vmatprep.subr.mxu0 0.0
    %1070 = vmatpush1.xpose.msra.mxu0 0.0
    %1071 = vmatprep.subr.mxu0 0.0
    %1072 = vmatpush1.xpose.msra.mxu0 0.0
    %1073 = vmatprep.subr.mxu0 0.0
    %1074 = vmatpush1.xpose.msra.mxu0 0.0
    %1075 = vmatprep.subr.mxu0 0.0
    %1076 = vmatpush1.xpose.msra.mxu0 0.0
    %1077 = vmatprep.subr.mxu0 0.0
    %1078 = vmatpush1.xpose.msra.mxu0 0.0
    %1079 = vmatprep.subr.mxu0 0.0
    %1080 = vmatpush1.xpose.msra.mxu0 0.0
    %1081 = vmatprep.subr.mxu0 0.0
    %1082 = vmatpush1.xpose.msra.mxu0 0.0
    %1083 = vmatprep.subr.mxu0 0.0
    %1084 = vmatpush1.xpose.msra.mxu0 0.0
    %1085 = vmatprep.subr.mxu0 0.0
    %1086 = vmatpush1.xpose.msra.mxu0 0.0
    %1087 = vmatprep.subr.mxu0 0.0
    %1088 = vmatpush1.xpose.msra.mxu0 0.0
    %1089 = vmatprep.mubr.f32.mxu0 0.0
    %1090 = vmatmul.mubr.f32.gmra.mrb[0].mxu0 %v1017
    %v1091 = vpop.f32.mrb[0].mxu0
    %v1092 = vadd.f32 0.0, %v1091
    %v1093 = vpop.f32.mrb[0].mxu0
    %1094 = vmatprep.mubr.f32.mxu0 0.0
    %1095 = vmatmul.mubr.f32.gmra.mrb[0].mxu0 %v1018
    %v1096 = vpop.f32.mrb[0].mxu0
    %v1097 = vadd.f32 0.0, %v1096
    %v1098 = vpop.f32.mrb[0].mxu0
    %1099 = vdwg.mxu0
    %1100 = vst [vmem:[#allocation6] sm:$0xff] %v1092
    %1101 = vst [vmem:[#allocation6 + $0x8] sm:$0xff] %v1097
    // Predicated region
    $region30: #{tpu_custom_call.1} parent=1 // pred_check
      _
    $region31: #{tpu_custom_call.1} parent=1 // pred_check_branch
      %1103 = sbr.rel (0) target = $region33
    $region32: #{tpu_custom_call.1} parent=1 // pred_region
      %s1105 = ssub.s32 256, 256
      %1106 = vsyncadd [#allocation5], %s1105
      %s1107 = sshll.u32 [#allocation6], 4
      %s1108 = int_to_ptr.vmem [resolvable:$true] %s1107
      %1113 = dma.vmem_to_hbm [thread:$0]  %s1108, 256, %s6, [#allocation5], 128, 128, 8
    $region33: #{tpu_custom_call.1} parent=1 // pred_fallthru
      _
    // Predicated region
    $region34: #{tpu_custom_call.1} parent=1 // pred_check
      _
    $region35: #{tpu_custom_call.1} parent=1 // pred_check_branch
      %1115 = sbr.rel (0) target = $region37
    $region36: #{tpu_custom_call.1} parent=1 // pred_region
      %1116 = dma.done [#allocation5], 256
    $region37: #{tpu_custom_call.1} parent=1 // pred_fallthru
      _
    %1117 = vsyncpa [#allocation4], 1
    %1118 = vsyncpa [#allocation5], 1

</llo_original>
